<compile_context>
chip_gen: v5e
topology: v5e:2x2
jax: 0.10.0
libtpu: 0.0.40
codegen_flags: <defaults>
</compile_context>

<pallas_src>
import functools

import numpy as np
import jax
import jax.numpy as jnp
from jax.experimental import pallas as pl
from jax.experimental.pallas import tpu as pltpu

K = 5          # conv kernel size
PAD = 2        # 'same' padding for k=5, stride=1
EPS = 1e-5     # GroupNorm eps (PyTorch default)

# Set to jnp.bfloat16 on v6e/v7x to halve matmul input bytes and double MXU
# throughput (accumulation stays f32). Kept f32 here so the 1e-4 check holds.
MATMUL_DTYPE = jnp.float32


def _decoding_block_kernel(skip_ref, x_ref, u_ref, m_ref,
                           w1_ref, b1_ref, g1_ref, bt1_ref,
                           w2_ref, b2_ref, g2_ref, bt2_ref,
                           o_ref, *, H, W):
    """Fused DecodingBlock forward for ONE batch element (grid axis 0 = batch).

    skip_ref: (1, C, H*W)       flattened skip connection (lane-dense)
    x_ref:    (1, C, h*w)       flattened low-res input (h=H/2, w=W/2)
    u_ref:    (h*w, H*W)        constant 0/1 nearest-upsample matrix
    m_ref:    (K*K, H*W)        per-tap boundary masks (implicit zero padding)
    w*_ref:   (C, K*K*Cin)      conv weights flattened to (Cout, taps*Cin)
    b/g/bt:   (C, 1)            conv bias / GroupNorm gamma / GroupNorm beta
    o_ref:    (1, C, H*W)       output (lane-dense)
    """
    HW = H * W
    C = o_ref.shape[1]

    # Nearest 2x upsample as one exact 0/1 matmul: (C, h*w) @ (h*w, H*W).
    x_up = jnp.dot(x_ref[0].astype(jnp.float32), u_ref[...],
                   preferred_element_type=jnp.float32)

    # Channel concat [skip ; upsample(x)] -> (2C, H*W), lane-dense slab.
    a0 = jnp.concatenate([skip_ref[0].astype(jnp.float32), x_up], axis=0)

    def conv_gn_relu(a, w_ref, b_ref, g_ref, beta_ref):
        # im2col via 25 static masked lane-shifts -> single MXU matmul (K=25*Cin).
        cols = []
        for dy in range(K):
            for dx in range(K):
                t = dy * K + dx
                s = (dy - PAD) * W + (dx - PAD)        # static flat shift
                shifted = a if s == 0 else jnp.roll(a, -s, axis=1)
                cols.append(shifted * m_ref[t:t + 1, :])   # zero-pad halo
        slab = jnp.concatenate(cols, axis=0)               # (K*K*Cin, H*W)
        y = jnp.dot(w_ref[...].astype(MATMUL_DTYPE),
                    slab.astype(MATMUL_DTYPE),
                    preferred_element_type=jnp.float32)    # (C, H*W) lane-dense
        y = y + b_ref[...]                                  # (C,1) broadcast

        # GroupNorm(num_groups=1): single-pass stats over the whole sample.
        n = y.shape[0] * y.shape[1]
        mean = jnp.sum(y) / n
        var = jnp.sum(y * y) / n - mean * mean
        y = (y - mean) * jax.lax.rsqrt(var + EPS)
        y = y * g_ref[...] + beta_ref[...]
        return jnp.maximum(y, 0.0)                          # ReLU

    y1 = conv_gn_relu(a0, w1_ref, b1_ref, g1_ref, bt1_ref)
    y2 = conv_gn_relu(y1, w2_ref, b2_ref, g2_ref, bt2_ref)

    o_ref[...] = y2.reshape(1, C, HW).astype(o_ref.dtype)


# ----------------------- host-side constant helpers -------------------------
def _tap_masks(H, W):
    """(K*K, H*W) f32 masks: 1 where the shifted tap lands inside the image."""
    yy, xx = np.meshgrid(np.arange(H), np.arange(W), indexing="ij")
    yy = yy.reshape(-1)
    xx = xx.reshape(-1)
    rows = []
    for dy in range(K):
        for dx in range(K):
            oy, ox = dy - PAD, dx - PAD
            rows.append((yy + oy >= 0) & (yy + oy < H)
                        & (xx + ox >= 0) & (xx + ox < W))
    return jnp.asarray(np.stack(rows).astype(np.float32))


def _upsample_matrix(h, w):
    """(h*w, 2h*2w) f32 0/1 matrix implementing nearest x2 upsampling."""
    H, W = 2 * h, 2 * w
    Y, X = np.meshgrid(np.arange(H), np.arange(W), indexing="ij")
    src = ((Y // 2) * w + (X // 2)).reshape(-1)            # (H*W,)
    return jnp.asarray(
        (np.arange(h * w)[:, None] == src[None, :]).astype(np.float32))


# --------------------------------- wrapper -----------------------------------
@jax.jit
def decoding_block_forward(skip_nchw, x_nchw, params):
    """DecodingBlock.forward (module_type='Unet', upsampling_type='nearest')."""
    B, C, H, W = skip_nchw.shape
    h, w = x_nchw.shape[2], x_nchw.shape[3]
    HW = H * W

    # Free reshapes only — no transpose / repeat / concat / pad passes in HBM.
    skip_f = skip_nchw.reshape(B, C, HW)
    x_f = x_nchw.reshape(B, C, h * w)

    u = _upsample_matrix(h, w)        # (h*w, HW) constant
    masks = _tap_masks(H, W)          # (K*K, HW) constant

    # HWIO -> (Cout, K*K*Cin); row order (dy, dx, ci) matches the im2col slab.
    wf1 = jnp.transpose(params["w1"], (3, 0, 1, 2)).reshape(C, K * K * 2 * C)
    wf2 = jnp.transpose(params["w2"], (3, 0, 1, 2)).reshape(C, K * K * C)
    col = lambda v: v.reshape(C, 1)

    const2d = lambda b: (0, 0)
    grid_spec = pltpu.PrefetchScalarGridSpec(
        num_scalar_prefetch=0,
        grid=(B,),
        in_specs=[
            pl.BlockSpec((1, C, HW), lambda b: (b, 0, 0)),     # skip
            pl.BlockSpec((1, C, h * w), lambda b: (b, 0, 0)),  # x (low-res)
            pl.BlockSpec((h * w, HW), const2d),                # upsample matrix
            pl.BlockSpec((K * K, HW), const2d),                # tap masks
            pl.BlockSpec((C, K * K * 2 * C), const2d),         # wf1
            pl.BlockSpec((C, 1), const2d),                     # b1
            pl.BlockSpec((C, 1), const2d),                     # g1
            pl.BlockSpec((C, 1), const2d),                     # bt1
            pl.BlockSpec((C, K * K * C), const2d),             # wf2
            pl.BlockSpec((C, 1), const2d),                     # b2
            pl.BlockSpec((C, 1), const2d),                     # g2
            pl.BlockSpec((C, 1), const2d),                     # bt2
        ],
        out_specs=pl.BlockSpec((1, C, HW), lambda b: (b, 0, 0)),
    )
    out_flat = pl.pallas_call(
        functools.partial(_decoding_block_kernel, H=H, W=W),
        out_shape=jax.ShapeDtypeStruct((B, C, HW), skip_nchw.dtype),
        grid_spec=grid_spec,
        compiler_params=pltpu.CompilerParams(
            dimension_semantics=("parallel",)),
    )(skip_f, x_f, u, masks,
      wf1, col(params["b1"]), col(params["g1"]), col(params["bt1"]),
      wf2, col(params["b2"]), col(params["g2"]), col(params["bt2"]))
    return out_flat.reshape(B, C, H, W)


# ---------------------------- pure-JAX reference ----------------------------
def _ref_conv_block(x, wv, b, gamma, beta):
    y = jax.lax.conv_general_dilated(
        x, wv, window_strides=(1, 1), padding=((PAD, PAD), (PAD, PAD)),
        dimension_numbers=("NCHW", "HWIO", "NCHW"))
    y = y + b.reshape(1, -1, 1, 1)
    mean = jnp.mean(y, axis=(1, 2, 3), keepdims=True)
    var = jnp.var(y, axis=(1, 2, 3), keepdims=True)
    y = (y - mean) * jax.lax.rsqrt(var + EPS)
    y = y * gamma.reshape(1, -1, 1, 1) + beta.reshape(1, -1, 1, 1)
    return jnp.maximum(y, 0.0)


def _ref_forward(skip, x, params):
    x = jnp.repeat(jnp.repeat(x, 2, axis=2), 2, axis=3)       # nearest x2
    x = jnp.concatenate([skip, x], axis=1)                    # channel concat
    x = _ref_conv_block(x, params["w1"], params["b1"], params["g1"], params["bt1"])
    x = _ref_conv_block(x, params["w2"], params["b2"], params["g2"], params["bt2"])
    return x


# --------------------------------- driver -----------------------------------
if __name__ == "__main__":
    key = jax.random.PRNGKey(0)
    B = 2
    C = 4          # in_channels_skip_connection
    H = W = 16     # skip spatial size; x comes in at H/2 x W/2

    k_skip, k_x, k1, k2, k3, k4, k5, k6, k7, k8 = jax.random.split(key, 10)

    # Inputs (PyTorch NCHW convention).
    skip = jax.random.normal(k_skip, (B, C, H, W), jnp.float32)
    x = jax.random.normal(k_x, (B, C, H // 2, W // 2), jnp.float32)

    # Deterministically initialized parameters (HWIO weights).
    params = {
        "w1": 0.1 * jax.random.normal(k1, (K, K, 2 * C, C), jnp.float32),
        "b1": 0.05 * jax.random.normal(k2, (C,), jnp.float32),
        "g1": 1.0 + 0.1 * jax.random.normal(k3, (C,), jnp.float32),
        "bt1": 0.05 * jax.random.normal(k4, (C,), jnp.float32),
        "w2": 0.1 * jax.random.normal(k5, (K, K, C, C), jnp.float32),
        "b2": 0.05 * jax.random.normal(k6, (C,), jnp.float32),
        "g2": 1.0 + 0.1 * jax.random.normal(k7, (C,), jnp.float32),
        "bt2": 0.05 * jax.random.normal(k8, (C,), jnp.float32),
    }

    out = jax.block_until_ready(decoding_block_forward(skip, x, params))
    ref = jax.block_until_ready(_ref_forward(skip, x, params))

    assert out.shape == (B, C, H, W), out.shape
    assert jnp.allclose(out, ref, atol=1e-4, rtol=1e-4), (
        float(jnp.max(jnp.abs(out - ref))))

    print("KERNEL_OK")
</pallas_src>

<mosaic_0001>
module attributes {stable_mosaic.version = 11 : i64} {
  func.func @_decoding_block_kernel(%arg0: i32, %arg1: memref<1x4x256xf32, #tpu.memory_space<vmem>>, %arg2: memref<1x4x64xf32, #tpu.memory_space<vmem>>, %arg3: memref<64x256xf32, #tpu.memory_space<vmem>>, %arg4: memref<25x256xf32, #tpu.memory_space<vmem>>, %arg5: memref<4x200xf32, #tpu.memory_space<vmem>>, %arg6: memref<4x1xf32, #tpu.memory_space<vmem>>, %arg7: memref<4x1xf32, #tpu.memory_space<vmem>>, %arg8: memref<4x1xf32, #tpu.memory_space<vmem>>, %arg9: memref<4x100xf32, #tpu.memory_space<vmem>>, %arg10: memref<4x1xf32, #tpu.memory_space<vmem>>, %arg11: memref<4x1xf32, #tpu.memory_space<vmem>>, %arg12: memref<4x1xf32, #tpu.memory_space<vmem>>, %arg13: memref<1x4x256xf32, #tpu.memory_space<vmem>>) attributes {dimension_semantics = [#tpu.dimension_semantics<parallel>], iteration_bounds = array<i64: 2>, scalar_prefetch = 0 : i64, scratch_operands = 0 : i64, tpu.core_type = #tpu.core_type<tc>, window_params = [{transform_indices = @transform_0, window_bounds = array<i64: 1, 4, 256>}, {transform_indices = @transform_1, window_bounds = array<i64: 1, 4, 64>}, {pipeline_mode = #tpu.pipeline_mode<synchronous>, transform_indices = @transform_2, window_bounds = array<i64: 64, 256>}, {pipeline_mode = #tpu.pipeline_mode<synchronous>, transform_indices = @transform_3, window_bounds = array<i64: 25, 256>}, {pipeline_mode = #tpu.pipeline_mode<synchronous>, transform_indices = @transform_4, window_bounds = array<i64: 4, 200>}, {pipeline_mode = #tpu.pipeline_mode<synchronous>, transform_indices = @transform_5, window_bounds = array<i64: 4, 1>}, {pipeline_mode = #tpu.pipeline_mode<synchronous>, transform_indices = @transform_6, window_bounds = array<i64: 4, 1>}, {pipeline_mode = #tpu.pipeline_mode<synchronous>, transform_indices = @transform_7, window_bounds = array<i64: 4, 1>}, {pipeline_mode = #tpu.pipeline_mode<synchronous>, transform_indices = @transform_8, window_bounds = array<i64: 4, 100>}, {pipeline_mode = #tpu.pipeline_mode<synchronous>, transform_indices = @transform_9, window_bounds = array<i64: 4, 1>}, {pipeline_mode = #tpu.pipeline_mode<synchronous>, transform_indices = @transform_10, window_bounds = array<i64: 4, 1>}, {pipeline_mode = #tpu.pipeline_mode<synchronous>, transform_indices = @transform_11, window_bounds = array<i64: 4, 1>}, {transform_indices = @transform_12, window_bounds = array<i64: 1, 4, 256>}]} {
    %c0 = arith.constant 0 : index
    %c0_0 = arith.constant 0 : index
    %c0_1 = arith.constant 0 : index
    %0 = vector.load %arg2[%c0, %c0_0, %c0_1] : memref<1x4x64xf32, #tpu.memory_space<vmem>>, vector<1x4x64xf32>
    %1 = vector.shape_cast %0 : vector<1x4x64xf32> to vector<4x64xf32>
    %c0_2 = arith.constant 0 : index
    %c0_3 = arith.constant 0 : index
    %2 = vector.load %arg3[%c0_2, %c0_3] : memref<64x256xf32, #tpu.memory_space<vmem>>, vector<64x256xf32>
    %cst = arith.constant dense<0.000000e+00> : vector<4x256xf32>
    %3 = tpu.matmul %1, %2, %cst {dimension_numbers = #tpu.dot_dimension_numbers<[1], [0], [0], [1], [0, 0, 1, 1], [], []>} : vector<4x64xf32>, vector<64x256xf32>, vector<4x256xf32> -> vector<4x256xf32>
    %c0_4 = arith.constant 0 : index
    %c0_5 = arith.constant 0 : index
    %c0_6 = arith.constant 0 : index
    %4 = vector.load %arg1[%c0_4, %c0_5, %c0_6] : memref<1x4x256xf32, #tpu.memory_space<vmem>>, vector<1x4x256xf32>
    %5 = vector.shape_cast %4 : vector<1x4x256xf32> to vector<4x256xf32>
    %6 = tpu.concatenate %5, %3 in 0 : vector<4x256xf32>, vector<4x256xf32> -> vector<8x256xf32>
    %7 = vector.extract_strided_slice %6 {offsets = [0, 222], sizes = [8, 34], strides = [1, 1]} : vector<8x256xf32> to vector<8x34xf32>
    %8 = vector.extract_strided_slice %6 {offsets = [0, 0], sizes = [8, 222], strides = [1, 1]} : vector<8x256xf32> to vector<8x222xf32>
    %9 = tpu.concatenate %7, %8 in 1 : vector<8x34xf32>, vector<8x222xf32> -> vector<8x256xf32>
    %c0_7 = arith.constant 0 : index
    %c0_8 = arith.constant 0 : index
    %10 = vector.load %arg4[%c0_7, %c0_8] : memref<25x256xf32, #tpu.memory_space<vmem>>, vector<1x256xf32>
    %11 = vector.broadcast %10 : vector<1x256xf32> to vector<8x256xf32>
    %12 = arith.mulf %9, %11 : vector<8x256xf32>
    %13 = vector.extract_strided_slice %6 {offsets = [0, 223], sizes = [8, 33], strides = [1, 1]} : vector<8x256xf32> to vector<8x33xf32>
    %14 = vector.extract_strided_slice %6 {offsets = [0, 0], sizes = [8, 223], strides = [1, 1]} : vector<8x256xf32> to vector<8x223xf32>
    %15 = tpu.concatenate %13, %14 in 1 : vector<8x33xf32>, vector<8x223xf32> -> vector<8x256xf32>
    %c1 = arith.constant 1 : index
    %c0_9 = arith.constant 0 : index
    %16 = vector.load %arg4[%c1, %c0_9] : memref<25x256xf32, #tpu.memory_space<vmem>>, vector<1x256xf32>
    %17 = vector.broadcast %16 : vector<1x256xf32> to vector<8x256xf32>
    %18 = arith.mulf %15, %17 : vector<8x256xf32>
    %19 = vector.extract_strided_slice %6 {offsets = [0, 224], sizes = [8, 32], strides = [1, 1]} : vector<8x256xf32> to vector<8x32xf32>
    %20 = vector.extract_strided_slice %6 {offsets = [0, 0], sizes = [8, 224], strides = [1, 1]} : vector<8x256xf32> to vector<8x224xf32>
    %21 = tpu.concatenate %19, %20 in 1 : vector<8x32xf32>, vector<8x224xf32> -> vector<8x256xf32>
    %c2 = arith.constant 2 : index
    %c0_10 = arith.constant 0 : index
    %22 = vector.load %arg4[%c2, %c0_10] : memref<25x256xf32, #tpu.memory_space<vmem>>, vector<1x256xf32>
    %23 = vector.broadcast %22 : vector<1x256xf32> to vector<8x256xf32>
    %24 = arith.mulf %21, %23 : vector<8x256xf32>
    %25 = vector.extract_strided_slice %6 {offsets = [0, 225], sizes = [8, 31], strides = [1, 1]} : vector<8x256xf32> to vector<8x31xf32>
    %26 = vector.extract_strided_slice %6 {offsets = [0, 0], sizes = [8, 225], strides = [1, 1]} : vector<8x256xf32> to vector<8x225xf32>
    %27 = tpu.concatenate %25, %26 in 1 : vector<8x31xf32>, vector<8x225xf32> -> vector<8x256xf32>
    %c3 = arith.constant 3 : index
    %c0_11 = arith.constant 0 : index
    %28 = vector.load %arg4[%c3, %c0_11] : memref<25x256xf32, #tpu.memory_space<vmem>>, vector<1x256xf32>
    %29 = vector.broadcast %28 : vector<1x256xf32> to vector<8x256xf32>
    %30 = arith.mulf %27, %29 : vector<8x256xf32>
    %31 = vector.extract_strided_slice %6 {offsets = [0, 226], sizes = [8, 30], strides = [1, 1]} : vector<8x256xf32> to vector<8x30xf32>
    %32 = vector.extract_strided_slice %6 {offsets = [0, 0], sizes = [8, 226], strides = [1, 1]} : vector<8x256xf32> to vector<8x226xf32>
    %33 = tpu.concatenate %31, %32 in 1 : vector<8x30xf32>, vector<8x226xf32> -> vector<8x256xf32>
    %c4 = arith.constant 4 : index
    %c0_12 = arith.constant 0 : index
    %34 = vector.load %arg4[%c4, %c0_12] : memref<25x256xf32, #tpu.memory_space<vmem>>, vector<1x256xf32>
    %35 = vector.broadcast %34 : vector<1x256xf32> to vector<8x256xf32>
    %36 = arith.mulf %33, %35 : vector<8x256xf32>
    %37 = vector.extract_strided_slice %6 {offsets = [0, 238], sizes = [8, 18], strides = [1, 1]} : vector<8x256xf32> to vector<8x18xf32>
    %38 = vector.extract_strided_slice %6 {offsets = [0, 0], sizes = [8, 238], strides = [1, 1]} : vector<8x256xf32> to vector<8x238xf32>
    %39 = tpu.concatenate %37, %38 in 1 : vector<8x18xf32>, vector<8x238xf32> -> vector<8x256xf32>
    %c5 = arith.constant 5 : index
    %c0_13 = arith.constant 0 : index
    %40 = vector.load %arg4[%c5, %c0_13] : memref<25x256xf32, #tpu.memory_space<vmem>>, vector<1x256xf32>
    %41 = vector.broadcast %40 : vector<1x256xf32> to vector<8x256xf32>
    %42 = arith.mulf %39, %41 : vector<8x256xf32>
    %43 = vector.extract_strided_slice %6 {offsets = [0, 239], sizes = [8, 17], strides = [1, 1]} : vector<8x256xf32> to vector<8x17xf32>
    %44 = vector.extract_strided_slice %6 {offsets = [0, 0], sizes = [8, 239], strides = [1, 1]} : vector<8x256xf32> to vector<8x239xf32>
    %45 = tpu.concatenate %43, %44 in 1 : vector<8x17xf32>, vector<8x239xf32> -> vector<8x256xf32>
    %c6 = arith.constant 6 : index
    %c0_14 = arith.constant 0 : index
    %46 = vector.load %arg4[%c6, %c0_14] : memref<25x256xf32, #tpu.memory_space<vmem>>, vector<1x256xf32>
    %47 = vector.broadcast %46 : vector<1x256xf32> to vector<8x256xf32>
    %48 = arith.mulf %45, %47 : vector<8x256xf32>
    %49 = vector.extract_strided_slice %6 {offsets = [0, 240], sizes = [8, 16], strides = [1, 1]} : vector<8x256xf32> to vector<8x16xf32>
    %50 = vector.extract_strided_slice %6 {offsets = [0, 0], sizes = [8, 240], strides = [1, 1]} : vector<8x256xf32> to vector<8x240xf32>
    %51 = tpu.concatenate %49, %50 in 1 : vector<8x16xf32>, vector<8x240xf32> -> vector<8x256xf32>
    %c7 = arith.constant 7 : index
    %c0_15 = arith.constant 0 : index
    %52 = vector.load %arg4[%c7, %c0_15] : memref<25x256xf32, #tpu.memory_space<vmem>>, vector<1x256xf32>
    %53 = vector.broadcast %52 : vector<1x256xf32> to vector<8x256xf32>
    %54 = arith.mulf %51, %53 : vector<8x256xf32>
    %55 = vector.extract_strided_slice %6 {offsets = [0, 241], sizes = [8, 15], strides = [1, 1]} : vector<8x256xf32> to vector<8x15xf32>
    %56 = vector.extract_strided_slice %6 {offsets = [0, 0], sizes = [8, 241], strides = [1, 1]} : vector<8x256xf32> to vector<8x241xf32>
    %57 = tpu.concatenate %55, %56 in 1 : vector<8x15xf32>, vector<8x241xf32> -> vector<8x256xf32>
    %c8 = arith.constant 8 : index
    %c0_16 = arith.constant 0 : index
    %58 = vector.load %arg4[%c8, %c0_16] : memref<25x256xf32, #tpu.memory_space<vmem>>, vector<1x256xf32>
    %59 = vector.broadcast %58 : vector<1x256xf32> to vector<8x256xf32>
    %60 = arith.mulf %57, %59 : vector<8x256xf32>
    %61 = vector.extract_strided_slice %6 {offsets = [0, 242], sizes = [8, 14], strides = [1, 1]} : vector<8x256xf32> to vector<8x14xf32>
    %62 = vector.extract_strided_slice %6 {offsets = [0, 0], sizes = [8, 242], strides = [1, 1]} : vector<8x256xf32> to vector<8x242xf32>
    %63 = tpu.concatenate %61, %62 in 1 : vector<8x14xf32>, vector<8x242xf32> -> vector<8x256xf32>
    %c9 = arith.constant 9 : index
    %c0_17 = arith.constant 0 : index
    %64 = vector.load %arg4[%c9, %c0_17] : memref<25x256xf32, #tpu.memory_space<vmem>>, vector<1x256xf32>
    %65 = vector.broadcast %64 : vector<1x256xf32> to vector<8x256xf32>
    %66 = arith.mulf %63, %65 : vector<8x256xf32>
    %67 = vector.extract_strided_slice %6 {offsets = [0, 254], sizes = [8, 2], strides = [1, 1]} : vector<8x256xf32> to vector<8x2xf32>
    %68 = vector.extract_strided_slice %6 {offsets = [0, 0], sizes = [8, 254], strides = [1, 1]} : vector<8x256xf32> to vector<8x254xf32>
    %69 = tpu.concatenate %67, %68 in 1 : vector<8x2xf32>, vector<8x254xf32> -> vector<8x256xf32>
    %c10 = arith.constant 10 : index
    %c0_18 = arith.constant 0 : index
    %70 = vector.load %arg4[%c10, %c0_18] : memref<25x256xf32, #tpu.memory_space<vmem>>, vector<1x256xf32>
    %71 = vector.broadcast %70 : vector<1x256xf32> to vector<8x256xf32>
    %72 = arith.mulf %69, %71 : vector<8x256xf32>
    %73 = vector.extract_strided_slice %6 {offsets = [0, 255], sizes = [8, 1], strides = [1, 1]} : vector<8x256xf32> to vector<8x1xf32>
    %74 = vector.extract_strided_slice %6 {offsets = [0, 0], sizes = [8, 255], strides = [1, 1]} : vector<8x256xf32> to vector<8x255xf32>
    %75 = tpu.concatenate %73, %74 in 1 : vector<8x1xf32>, vector<8x255xf32> -> vector<8x256xf32>
    %c11 = arith.constant 11 : index
    %c0_19 = arith.constant 0 : index
    %76 = vector.load %arg4[%c11, %c0_19] : memref<25x256xf32, #tpu.memory_space<vmem>>, vector<1x256xf32>
    %77 = vector.broadcast %76 : vector<1x256xf32> to vector<8x256xf32>
    %78 = arith.mulf %75, %77 : vector<8x256xf32>
    %c12 = arith.constant 12 : index
    %c0_20 = arith.constant 0 : index
    %79 = vector.load %arg4[%c12, %c0_20] : memref<25x256xf32, #tpu.memory_space<vmem>>, vector<1x256xf32>
    %80 = vector.broadcast %79 : vector<1x256xf32> to vector<8x256xf32>
    %81 = arith.mulf %6, %80 : vector<8x256xf32>
    %82 = vector.extract_strided_slice %6 {offsets = [0, 1], sizes = [8, 255], strides = [1, 1]} : vector<8x256xf32> to vector<8x255xf32>
    %83 = vector.extract_strided_slice %6 {offsets = [0, 0], sizes = [8, 1], strides = [1, 1]} : vector<8x256xf32> to vector<8x1xf32>
    %84 = tpu.concatenate %82, %83 in 1 : vector<8x255xf32>, vector<8x1xf32> -> vector<8x256xf32>
    %c13 = arith.constant 13 : index
    %c0_21 = arith.constant 0 : index
    %85 = vector.load %arg4[%c13, %c0_21] : memref<25x256xf32, #tpu.memory_space<vmem>>, vector<1x256xf32>
    %86 = vector.broadcast %85 : vector<1x256xf32> to vector<8x256xf32>
    %87 = arith.mulf %84, %86 : vector<8x256xf32>
    %88 = vector.extract_strided_slice %6 {offsets = [0, 2], sizes = [8, 254], strides = [1, 1]} : vector<8x256xf32> to vector<8x254xf32>
    %89 = vector.extract_strided_slice %6 {offsets = [0, 0], sizes = [8, 2], strides = [1, 1]} : vector<8x256xf32> to vector<8x2xf32>
    %90 = tpu.concatenate %88, %89 in 1 : vector<8x254xf32>, vector<8x2xf32> -> vector<8x256xf32>
    %c14 = arith.constant 14 : index
    %c0_22 = arith.constant 0 : index
    %91 = vector.load %arg4[%c14, %c0_22] : memref<25x256xf32, #tpu.memory_space<vmem>>, vector<1x256xf32>
    %92 = vector.broadcast %91 : vector<1x256xf32> to vector<8x256xf32>
    %93 = arith.mulf %90, %92 : vector<8x256xf32>
    %94 = vector.extract_strided_slice %6 {offsets = [0, 14], sizes = [8, 242], strides = [1, 1]} : vector<8x256xf32> to vector<8x242xf32>
    %95 = vector.extract_strided_slice %6 {offsets = [0, 0], sizes = [8, 14], strides = [1, 1]} : vector<8x256xf32> to vector<8x14xf32>
    %96 = tpu.concatenate %94, %95 in 1 : vector<8x242xf32>, vector<8x14xf32> -> vector<8x256xf32>
    %c15 = arith.constant 15 : index
    %c0_23 = arith.constant 0 : index
    %97 = vector.load %arg4[%c15, %c0_23] : memref<25x256xf32, #tpu.memory_space<vmem>>, vector<1x256xf32>
    %98 = vector.broadcast %97 : vector<1x256xf32> to vector<8x256xf32>
    %99 = arith.mulf %96, %98 : vector<8x256xf32>
    %100 = vector.extract_strided_slice %6 {offsets = [0, 15], sizes = [8, 241], strides = [1, 1]} : vector<8x256xf32> to vector<8x241xf32>
    %101 = vector.extract_strided_slice %6 {offsets = [0, 0], sizes = [8, 15], strides = [1, 1]} : vector<8x256xf32> to vector<8x15xf32>
    %102 = tpu.concatenate %100, %101 in 1 : vector<8x241xf32>, vector<8x15xf32> -> vector<8x256xf32>
    %c16 = arith.constant 16 : index
    %c0_24 = arith.constant 0 : index
    %103 = vector.load %arg4[%c16, %c0_24] : memref<25x256xf32, #tpu.memory_space<vmem>>, vector<1x256xf32>
    %104 = vector.broadcast %103 : vector<1x256xf32> to vector<8x256xf32>
    %105 = arith.mulf %102, %104 : vector<8x256xf32>
    %106 = vector.extract_strided_slice %6 {offsets = [0, 16], sizes = [8, 240], strides = [1, 1]} : vector<8x256xf32> to vector<8x240xf32>
    %107 = vector.extract_strided_slice %6 {offsets = [0, 0], sizes = [8, 16], strides = [1, 1]} : vector<8x256xf32> to vector<8x16xf32>
    %108 = tpu.concatenate %106, %107 in 1 : vector<8x240xf32>, vector<8x16xf32> -> vector<8x256xf32>
    %c17 = arith.constant 17 : index
    %c0_25 = arith.constant 0 : index
    %109 = vector.load %arg4[%c17, %c0_25] : memref<25x256xf32, #tpu.memory_space<vmem>>, vector<1x256xf32>
    %110 = vector.broadcast %109 : vector<1x256xf32> to vector<8x256xf32>
    %111 = arith.mulf %108, %110 : vector<8x256xf32>
    %112 = vector.extract_strided_slice %6 {offsets = [0, 17], sizes = [8, 239], strides = [1, 1]} : vector<8x256xf32> to vector<8x239xf32>
    %113 = vector.extract_strided_slice %6 {offsets = [0, 0], sizes = [8, 17], strides = [1, 1]} : vector<8x256xf32> to vector<8x17xf32>
    %114 = tpu.concatenate %112, %113 in 1 : vector<8x239xf32>, vector<8x17xf32> -> vector<8x256xf32>
    %c18 = arith.constant 18 : index
    %c0_26 = arith.constant 0 : index
    %115 = vector.load %arg4[%c18, %c0_26] : memref<25x256xf32, #tpu.memory_space<vmem>>, vector<1x256xf32>
    %116 = vector.broadcast %115 : vector<1x256xf32> to vector<8x256xf32>
    %117 = arith.mulf %114, %116 : vector<8x256xf32>
    %118 = vector.extract_strided_slice %6 {offsets = [0, 18], sizes = [8, 238], strides = [1, 1]} : vector<8x256xf32> to vector<8x238xf32>
    %119 = vector.extract_strided_slice %6 {offsets = [0, 0], sizes = [8, 18], strides = [1, 1]} : vector<8x256xf32> to vector<8x18xf32>
    %120 = tpu.concatenate %118, %119 in 1 : vector<8x238xf32>, vector<8x18xf32> -> vector<8x256xf32>
    %c19 = arith.constant 19 : index
    %c0_27 = arith.constant 0 : index
    %121 = vector.load %arg4[%c19, %c0_27] : memref<25x256xf32, #tpu.memory_space<vmem>>, vector<1x256xf32>
    %122 = vector.broadcast %121 : vector<1x256xf32> to vector<8x256xf32>
    %123 = arith.mulf %120, %122 : vector<8x256xf32>
    %124 = vector.extract_strided_slice %6 {offsets = [0, 30], sizes = [8, 226], strides = [1, 1]} : vector<8x256xf32> to vector<8x226xf32>
    %125 = vector.extract_strided_slice %6 {offsets = [0, 0], sizes = [8, 30], strides = [1, 1]} : vector<8x256xf32> to vector<8x30xf32>
    %126 = tpu.concatenate %124, %125 in 1 : vector<8x226xf32>, vector<8x30xf32> -> vector<8x256xf32>
    %c20 = arith.constant 20 : index
    %c0_28 = arith.constant 0 : index
    %127 = vector.load %arg4[%c20, %c0_28] : memref<25x256xf32, #tpu.memory_space<vmem>>, vector<1x256xf32>
    %128 = vector.broadcast %127 : vector<1x256xf32> to vector<8x256xf32>
    %129 = arith.mulf %126, %128 : vector<8x256xf32>
    %130 = vector.extract_strided_slice %6 {offsets = [0, 31], sizes = [8, 225], strides = [1, 1]} : vector<8x256xf32> to vector<8x225xf32>
    %131 = vector.extract_strided_slice %6 {offsets = [0, 0], sizes = [8, 31], strides = [1, 1]} : vector<8x256xf32> to vector<8x31xf32>
    %132 = tpu.concatenate %130, %131 in 1 : vector<8x225xf32>, vector<8x31xf32> -> vector<8x256xf32>
    %c21 = arith.constant 21 : index
    %c0_29 = arith.constant 0 : index
    %133 = vector.load %arg4[%c21, %c0_29] : memref<25x256xf32, #tpu.memory_space<vmem>>, vector<1x256xf32>
    %134 = vector.broadcast %133 : vector<1x256xf32> to vector<8x256xf32>
    %135 = arith.mulf %132, %134 : vector<8x256xf32>
    %136 = vector.extract_strided_slice %6 {offsets = [0, 32], sizes = [8, 224], strides = [1, 1]} : vector<8x256xf32> to vector<8x224xf32>
    %137 = vector.extract_strided_slice %6 {offsets = [0, 0], sizes = [8, 32], strides = [1, 1]} : vector<8x256xf32> to vector<8x32xf32>
    %138 = tpu.concatenate %136, %137 in 1 : vector<8x224xf32>, vector<8x32xf32> -> vector<8x256xf32>
    %c22 = arith.constant 22 : index
    %c0_30 = arith.constant 0 : index
    %139 = vector.load %arg4[%c22, %c0_30] : memref<25x256xf32, #tpu.memory_space<vmem>>, vector<1x256xf32>
    %140 = vector.broadcast %139 : vector<1x256xf32> to vector<8x256xf32>
    %141 = arith.mulf %138, %140 : vector<8x256xf32>
    %142 = vector.extract_strided_slice %6 {offsets = [0, 33], sizes = [8, 223], strides = [1, 1]} : vector<8x256xf32> to vector<8x223xf32>
    %143 = vector.extract_strided_slice %6 {offsets = [0, 0], sizes = [8, 33], strides = [1, 1]} : vector<8x256xf32> to vector<8x33xf32>
    %144 = tpu.concatenate %142, %143 in 1 : vector<8x223xf32>, vector<8x33xf32> -> vector<8x256xf32>
    %c23 = arith.constant 23 : index
    %c0_31 = arith.constant 0 : index
    %145 = vector.load %arg4[%c23, %c0_31] : memref<25x256xf32, #tpu.memory_space<vmem>>, vector<1x256xf32>
    %146 = vector.broadcast %145 : vector<1x256xf32> to vector<8x256xf32>
    %147 = arith.mulf %144, %146 : vector<8x256xf32>
    %148 = vector.extract_strided_slice %6 {offsets = [0, 34], sizes = [8, 222], strides = [1, 1]} : vector<8x256xf32> to vector<8x222xf32>
    %149 = vector.extract_strided_slice %6 {offsets = [0, 0], sizes = [8, 34], strides = [1, 1]} : vector<8x256xf32> to vector<8x34xf32>
    %150 = tpu.concatenate %148, %149 in 1 : vector<8x222xf32>, vector<8x34xf32> -> vector<8x256xf32>
    %c24 = arith.constant 24 : index
    %c0_32 = arith.constant 0 : index
    %151 = vector.load %arg4[%c24, %c0_32] : memref<25x256xf32, #tpu.memory_space<vmem>>, vector<1x256xf32>
    %152 = vector.broadcast %151 : vector<1x256xf32> to vector<8x256xf32>
    %153 = arith.mulf %150, %152 : vector<8x256xf32>
    %154 = tpu.concatenate %12, %18, %24, %30, %36, %42, %48, %54, %60, %66, %72, %78, %81, %87, %93, %99 in 0 : vector<8x256xf32>, vector<8x256xf32>, vector<8x256xf32>, vector<8x256xf32>, vector<8x256xf32>, vector<8x256xf32>, vector<8x256xf32>, vector<8x256xf32>, vector<8x256xf32>, vector<8x256xf32>, vector<8x256xf32>, vector<8x256xf32>, vector<8x256xf32>, vector<8x256xf32>, vector<8x256xf32>, vector<8x256xf32> -> vector<128x256xf32>
    %155 = tpu.concatenate %105, %111, %117, %123, %129, %135, %141, %147, %153 in 0 : vector<8x256xf32>, vector<8x256xf32>, vector<8x256xf32>, vector<8x256xf32>, vector<8x256xf32>, vector<8x256xf32>, vector<8x256xf32>, vector<8x256xf32>, vector<8x256xf32> -> vector<72x256xf32>
    %156 = tpu.concatenate %154, %155 in 0 : vector<128x256xf32>, vector<72x256xf32> -> vector<200x256xf32>
    %c0_33 = arith.constant 0 : index
    %c0_34 = arith.constant 0 : index
    %157 = vector.load %arg5[%c0_33, %c0_34] : memref<4x200xf32, #tpu.memory_space<vmem>>, vector<4x200xf32>
    %cst_35 = arith.constant dense<0.000000e+00> : vector<4x256xf32>
    %158 = tpu.matmul %157, %156, %cst_35 {dimension_numbers = #tpu.dot_dimension_numbers<[1], [0], [0], [1], [0, 0, 1, 1], [], []>} : vector<4x200xf32>, vector<200x256xf32>, vector<4x256xf32> -> vector<4x256xf32>
    %c0_36 = arith.constant 0 : index
    %c0_37 = arith.constant 0 : index
    %159 = vector.load %arg6[%c0_36, %c0_37] : memref<4x1xf32, #tpu.memory_space<vmem>>, vector<4x1xf32>
    %160 = vector.broadcast %159 : vector<4x1xf32> to vector<4x256xf32>
    %161 = arith.addf %158, %160 : vector<4x256xf32>
    %162 = vector.shape_cast %161 : vector<4x256xf32> to vector<1x4x256xf32>
    %cst_38 = arith.constant dense<0.000000e+00> : vector<1xf32>
    %163 = vector.multi_reduction <add>, %162, %cst_38 [1, 2] : vector<1x4x256xf32> to vector<1xf32>
    %164 = vector.shape_cast %163 : vector<1xf32> to vector<1x1x1xf32>
    %165 = vector.extract %164[0, 0, 0] : f32 from vector<1x1x1xf32>
    %cst_39 = arith.constant 1.024000e+03 : f32
    %166 = arith.divf %165, %cst_39 : f32
    %167 = arith.mulf %161, %161 : vector<4x256xf32>
    %168 = vector.shape_cast %167 : vector<4x256xf32> to vector<1x4x256xf32>
    %cst_40 = arith.constant dense<0.000000e+00> : vector<1xf32>
    %169 = vector.multi_reduction <add>, %168, %cst_40 [1, 2] : vector<1x4x256xf32> to vector<1xf32>
    %170 = vector.shape_cast %169 : vector<1xf32> to vector<1x1x1xf32>
    %171 = vector.extract %170[0, 0, 0] : f32 from vector<1x1x1xf32>
    %cst_41 = arith.constant 1.024000e+03 : f32
    %172 = arith.divf %171, %cst_41 : f32
    %173 = arith.mulf %166, %166 : f32
    %174 = arith.subf %172, %173 : f32
    %175 = vector.broadcast %166 : f32 to vector<4x256xf32>
    %176 = arith.subf %161, %175 : vector<4x256xf32>
    %cst_42 = arith.constant 9.99999974E-6 : f32
    %177 = arith.addf %174, %cst_42 : f32
    %178 = math.rsqrt %177 : f32
    %179 = vector.broadcast %178 : f32 to vector<4x256xf32>
    %180 = arith.mulf %176, %179 : vector<4x256xf32>
    %c0_43 = arith.constant 0 : index
    %c0_44 = arith.constant 0 : index
    %181 = vector.load %arg7[%c0_43, %c0_44] : memref<4x1xf32, #tpu.memory_space<vmem>>, vector<4x1xf32>
    %182 = vector.broadcast %181 : vector<4x1xf32> to vector<4x256xf32>
    %183 = arith.mulf %180, %182 : vector<4x256xf32>
    %c0_45 = arith.constant 0 : index
    %c0_46 = arith.constant 0 : index
    %184 = vector.load %arg8[%c0_45, %c0_46] : memref<4x1xf32, #tpu.memory_space<vmem>>, vector<4x1xf32>
    %185 = vector.broadcast %184 : vector<4x1xf32> to vector<4x256xf32>
    %186 = arith.addf %183, %185 : vector<4x256xf32>
    %cst_47 = arith.constant 0.000000e+00 : f32
    %187 = vector.broadcast %cst_47 : f32 to vector<4x256xf32>
    %188 = arith.maximumf %186, %187 : vector<4x256xf32>
    %189 = vector.extract_strided_slice %188 {offsets = [0, 222], sizes = [4, 34], strides = [1, 1]} : vector<4x256xf32> to vector<4x34xf32>
    %190 = vector.extract_strided_slice %188 {offsets = [0, 0], sizes = [4, 222], strides = [1, 1]} : vector<4x256xf32> to vector<4x222xf32>
    %191 = tpu.concatenate %189, %190 in 1 : vector<4x34xf32>, vector<4x222xf32> -> vector<4x256xf32>
    %c0_48 = arith.constant 0 : index
    %c0_49 = arith.constant 0 : index
    %192 = vector.load %arg4[%c0_48, %c0_49] : memref<25x256xf32, #tpu.memory_space<vmem>>, vector<1x256xf32>
    %193 = vector.broadcast %192 : vector<1x256xf32> to vector<4x256xf32>
    %194 = arith.mulf %191, %193 : vector<4x256xf32>
    %195 = vector.extract_strided_slice %188 {offsets = [0, 223], sizes = [4, 33], strides = [1, 1]} : vector<4x256xf32> to vector<4x33xf32>
    %196 = vector.extract_strided_slice %188 {offsets = [0, 0], sizes = [4, 223], strides = [1, 1]} : vector<4x256xf32> to vector<4x223xf32>
    %197 = tpu.concatenate %195, %196 in 1 : vector<4x33xf32>, vector<4x223xf32> -> vector<4x256xf32>
    %c1_50 = arith.constant 1 : index
    %c0_51 = arith.constant 0 : index
    %198 = vector.load %arg4[%c1_50, %c0_51] : memref<25x256xf32, #tpu.memory_space<vmem>>, vector<1x256xf32>
    %199 = vector.broadcast %198 : vector<1x256xf32> to vector<4x256xf32>
    %200 = arith.mulf %197, %199 : vector<4x256xf32>
    %201 = vector.extract_strided_slice %188 {offsets = [0, 224], sizes = [4, 32], strides = [1, 1]} : vector<4x256xf32> to vector<4x32xf32>
    %202 = vector.extract_strided_slice %188 {offsets = [0, 0], sizes = [4, 224], strides = [1, 1]} : vector<4x256xf32> to vector<4x224xf32>
    %203 = tpu.concatenate %201, %202 in 1 : vector<4x32xf32>, vector<4x224xf32> -> vector<4x256xf32>
    %c2_52 = arith.constant 2 : index
    %c0_53 = arith.constant 0 : index
    %204 = vector.load %arg4[%c2_52, %c0_53] : memref<25x256xf32, #tpu.memory_space<vmem>>, vector<1x256xf32>
    %205 = vector.broadcast %204 : vector<1x256xf32> to vector<4x256xf32>
    %206 = arith.mulf %203, %205 : vector<4x256xf32>
    %207 = vector.extract_strided_slice %188 {offsets = [0, 225], sizes = [4, 31], strides = [1, 1]} : vector<4x256xf32> to vector<4x31xf32>
    %208 = vector.extract_strided_slice %188 {offsets = [0, 0], sizes = [4, 225], strides = [1, 1]} : vector<4x256xf32> to vector<4x225xf32>
    %209 = tpu.concatenate %207, %208 in 1 : vector<4x31xf32>, vector<4x225xf32> -> vector<4x256xf32>
    %c3_54 = arith.constant 3 : index
    %c0_55 = arith.constant 0 : index
    %210 = vector.load %arg4[%c3_54, %c0_55] : memref<25x256xf32, #tpu.memory_space<vmem>>, vector<1x256xf32>
    %211 = vector.broadcast %210 : vector<1x256xf32> to vector<4x256xf32>
    %212 = arith.mulf %209, %211 : vector<4x256xf32>
    %213 = vector.extract_strided_slice %188 {offsets = [0, 226], sizes = [4, 30], strides = [1, 1]} : vector<4x256xf32> to vector<4x30xf32>
    %214 = vector.extract_strided_slice %188 {offsets = [0, 0], sizes = [4, 226], strides = [1, 1]} : vector<4x256xf32> to vector<4x226xf32>
    %215 = tpu.concatenate %213, %214 in 1 : vector<4x30xf32>, vector<4x226xf32> -> vector<4x256xf32>
    %c4_56 = arith.constant 4 : index
    %c0_57 = arith.constant 0 : index
    %216 = vector.load %arg4[%c4_56, %c0_57] : memref<25x256xf32, #tpu.memory_space<vmem>>, vector<1x256xf32>
    %217 = vector.broadcast %216 : vector<1x256xf32> to vector<4x256xf32>
    %218 = arith.mulf %215, %217 : vector<4x256xf32>
    %219 = vector.extract_strided_slice %188 {offsets = [0, 238], sizes = [4, 18], strides = [1, 1]} : vector<4x256xf32> to vector<4x18xf32>
    %220 = vector.extract_strided_slice %188 {offsets = [0, 0], sizes = [4, 238], strides = [1, 1]} : vector<4x256xf32> to vector<4x238xf32>
    %221 = tpu.concatenate %219, %220 in 1 : vector<4x18xf32>, vector<4x238xf32> -> vector<4x256xf32>
    %c5_58 = arith.constant 5 : index
    %c0_59 = arith.constant 0 : index
    %222 = vector.load %arg4[%c5_58, %c0_59] : memref<25x256xf32, #tpu.memory_space<vmem>>, vector<1x256xf32>
    %223 = vector.broadcast %222 : vector<1x256xf32> to vector<4x256xf32>
    %224 = arith.mulf %221, %223 : vector<4x256xf32>
    %225 = vector.extract_strided_slice %188 {offsets = [0, 239], sizes = [4, 17], strides = [1, 1]} : vector<4x256xf32> to vector<4x17xf32>
    %226 = vector.extract_strided_slice %188 {offsets = [0, 0], sizes = [4, 239], strides = [1, 1]} : vector<4x256xf32> to vector<4x239xf32>
    %227 = tpu.concatenate %225, %226 in 1 : vector<4x17xf32>, vector<4x239xf32> -> vector<4x256xf32>
    %c6_60 = arith.constant 6 : index
    %c0_61 = arith.constant 0 : index
    %228 = vector.load %arg4[%c6_60, %c0_61] : memref<25x256xf32, #tpu.memory_space<vmem>>, vector<1x256xf32>
    %229 = vector.broadcast %228 : vector<1x256xf32> to vector<4x256xf32>
    %230 = arith.mulf %227, %229 : vector<4x256xf32>
    %231 = vector.extract_strided_slice %188 {offsets = [0, 240], sizes = [4, 16], strides = [1, 1]} : vector<4x256xf32> to vector<4x16xf32>
    %232 = vector.extract_strided_slice %188 {offsets = [0, 0], sizes = [4, 240], strides = [1, 1]} : vector<4x256xf32> to vector<4x240xf32>
    %233 = tpu.concatenate %231, %232 in 1 : vector<4x16xf32>, vector<4x240xf32> -> vector<4x256xf32>
    %c7_62 = arith.constant 7 : index
    %c0_63 = arith.constant 0 : index
    %234 = vector.load %arg4[%c7_62, %c0_63] : memref<25x256xf32, #tpu.memory_space<vmem>>, vector<1x256xf32>
    %235 = vector.broadcast %234 : vector<1x256xf32> to vector<4x256xf32>
    %236 = arith.mulf %233, %235 : vector<4x256xf32>
    %237 = vector.extract_strided_slice %188 {offsets = [0, 241], sizes = [4, 15], strides = [1, 1]} : vector<4x256xf32> to vector<4x15xf32>
    %238 = vector.extract_strided_slice %188 {offsets = [0, 0], sizes = [4, 241], strides = [1, 1]} : vector<4x256xf32> to vector<4x241xf32>
    %239 = tpu.concatenate %237, %238 in 1 : vector<4x15xf32>, vector<4x241xf32> -> vector<4x256xf32>
    %c8_64 = arith.constant 8 : index
    %c0_65 = arith.constant 0 : index
    %240 = vector.load %arg4[%c8_64, %c0_65] : memref<25x256xf32, #tpu.memory_space<vmem>>, vector<1x256xf32>
    %241 = vector.broadcast %240 : vector<1x256xf32> to vector<4x256xf32>
    %242 = arith.mulf %239, %241 : vector<4x256xf32>
    %243 = vector.extract_strided_slice %188 {offsets = [0, 242], sizes = [4, 14], strides = [1, 1]} : vector<4x256xf32> to vector<4x14xf32>
    %244 = vector.extract_strided_slice %188 {offsets = [0, 0], sizes = [4, 242], strides = [1, 1]} : vector<4x256xf32> to vector<4x242xf32>
    %245 = tpu.concatenate %243, %244 in 1 : vector<4x14xf32>, vector<4x242xf32> -> vector<4x256xf32>
    %c9_66 = arith.constant 9 : index
    %c0_67 = arith.constant 0 : index
    %246 = vector.load %arg4[%c9_66, %c0_67] : memref<25x256xf32, #tpu.memory_space<vmem>>, vector<1x256xf32>
    %247 = vector.broadcast %246 : vector<1x256xf32> to vector<4x256xf32>
    %248 = arith.mulf %245, %247 : vector<4x256xf32>
    %249 = vector.extract_strided_slice %188 {offsets = [0, 254], sizes = [4, 2], strides = [1, 1]} : vector<4x256xf32> to vector<4x2xf32>
    %250 = vector.extract_strided_slice %188 {offsets = [0, 0], sizes = [4, 254], strides = [1, 1]} : vector<4x256xf32> to vector<4x254xf32>
    %251 = tpu.concatenate %249, %250 in 1 : vector<4x2xf32>, vector<4x254xf32> -> vector<4x256xf32>
    %c10_68 = arith.constant 10 : index
    %c0_69 = arith.constant 0 : index
    %252 = vector.load %arg4[%c10_68, %c0_69] : memref<25x256xf32, #tpu.memory_space<vmem>>, vector<1x256xf32>
    %253 = vector.broadcast %252 : vector<1x256xf32> to vector<4x256xf32>
    %254 = arith.mulf %251, %253 : vector<4x256xf32>
    %255 = vector.extract_strided_slice %188 {offsets = [0, 255], sizes = [4, 1], strides = [1, 1]} : vector<4x256xf32> to vector<4x1xf32>
    %256 = vector.extract_strided_slice %188 {offsets = [0, 0], sizes = [4, 255], strides = [1, 1]} : vector<4x256xf32> to vector<4x255xf32>
    %257 = tpu.concatenate %255, %256 in 1 : vector<4x1xf32>, vector<4x255xf32> -> vector<4x256xf32>
    %c11_70 = arith.constant 11 : index
    %c0_71 = arith.constant 0 : index
    %258 = vector.load %arg4[%c11_70, %c0_71] : memref<25x256xf32, #tpu.memory_space<vmem>>, vector<1x256xf32>
    %259 = vector.broadcast %258 : vector<1x256xf32> to vector<4x256xf32>
    %260 = arith.mulf %257, %259 : vector<4x256xf32>
    %c12_72 = arith.constant 12 : index
    %c0_73 = arith.constant 0 : index
    %261 = vector.load %arg4[%c12_72, %c0_73] : memref<25x256xf32, #tpu.memory_space<vmem>>, vector<1x256xf32>
    %262 = vector.broadcast %261 : vector<1x256xf32> to vector<4x256xf32>
    %263 = arith.mulf %188, %262 : vector<4x256xf32>
    %264 = vector.extract_strided_slice %188 {offsets = [0, 1], sizes = [4, 255], strides = [1, 1]} : vector<4x256xf32> to vector<4x255xf32>
    %265 = vector.extract_strided_slice %188 {offsets = [0, 0], sizes = [4, 1], strides = [1, 1]} : vector<4x256xf32> to vector<4x1xf32>
    %266 = tpu.concatenate %264, %265 in 1 : vector<4x255xf32>, vector<4x1xf32> -> vector<4x256xf32>
    %c13_74 = arith.constant 13 : index
    %c0_75 = arith.constant 0 : index
    %267 = vector.load %arg4[%c13_74, %c0_75] : memref<25x256xf32, #tpu.memory_space<vmem>>, vector<1x256xf32>
    %268 = vector.broadcast %267 : vector<1x256xf32> to vector<4x256xf32>
    %269 = arith.mulf %266, %268 : vector<4x256xf32>
    %270 = vector.extract_strided_slice %188 {offsets = [0, 2], sizes = [4, 254], strides = [1, 1]} : vector<4x256xf32> to vector<4x254xf32>
    %271 = vector.extract_strided_slice %188 {offsets = [0, 0], sizes = [4, 2], strides = [1, 1]} : vector<4x256xf32> to vector<4x2xf32>
    %272 = tpu.concatenate %270, %271 in 1 : vector<4x254xf32>, vector<4x2xf32> -> vector<4x256xf32>
    %c14_76 = arith.constant 14 : index
    %c0_77 = arith.constant 0 : index
    %273 = vector.load %arg4[%c14_76, %c0_77] : memref<25x256xf32, #tpu.memory_space<vmem>>, vector<1x256xf32>
    %274 = vector.broadcast %273 : vector<1x256xf32> to vector<4x256xf32>
    %275 = arith.mulf %272, %274 : vector<4x256xf32>
    %276 = vector.extract_strided_slice %188 {offsets = [0, 14], sizes = [4, 242], strides = [1, 1]} : vector<4x256xf32> to vector<4x242xf32>
    %277 = vector.extract_strided_slice %188 {offsets = [0, 0], sizes = [4, 14], strides = [1, 1]} : vector<4x256xf32> to vector<4x14xf32>
    %278 = tpu.concatenate %276, %277 in 1 : vector<4x242xf32>, vector<4x14xf32> -> vector<4x256xf32>
    %c15_78 = arith.constant 15 : index
    %c0_79 = arith.constant 0 : index
    %279 = vector.load %arg4[%c15_78, %c0_79] : memref<25x256xf32, #tpu.memory_space<vmem>>, vector<1x256xf32>
    %280 = vector.broadcast %279 : vector<1x256xf32> to vector<4x256xf32>
    %281 = arith.mulf %278, %280 : vector<4x256xf32>
    %282 = vector.extract_strided_slice %188 {offsets = [0, 15], sizes = [4, 241], strides = [1, 1]} : vector<4x256xf32> to vector<4x241xf32>
    %283 = vector.extract_strided_slice %188 {offsets = [0, 0], sizes = [4, 15], strides = [1, 1]} : vector<4x256xf32> to vector<4x15xf32>
    %284 = tpu.concatenate %282, %283 in 1 : vector<4x241xf32>, vector<4x15xf32> -> vector<4x256xf32>
    %c16_80 = arith.constant 16 : index
    %c0_81 = arith.constant 0 : index
    %285 = vector.load %arg4[%c16_80, %c0_81] : memref<25x256xf32, #tpu.memory_space<vmem>>, vector<1x256xf32>
    %286 = vector.broadcast %285 : vector<1x256xf32> to vector<4x256xf32>
    %287 = arith.mulf %284, %286 : vector<4x256xf32>
    %288 = vector.extract_strided_slice %188 {offsets = [0, 16], sizes = [4, 240], strides = [1, 1]} : vector<4x256xf32> to vector<4x240xf32>
    %289 = vector.extract_strided_slice %188 {offsets = [0, 0], sizes = [4, 16], strides = [1, 1]} : vector<4x256xf32> to vector<4x16xf32>
    %290 = tpu.concatenate %288, %289 in 1 : vector<4x240xf32>, vector<4x16xf32> -> vector<4x256xf32>
    %c17_82 = arith.constant 17 : index
    %c0_83 = arith.constant 0 : index
    %291 = vector.load %arg4[%c17_82, %c0_83] : memref<25x256xf32, #tpu.memory_space<vmem>>, vector<1x256xf32>
    %292 = vector.broadcast %291 : vector<1x256xf32> to vector<4x256xf32>
    %293 = arith.mulf %290, %292 : vector<4x256xf32>
    %294 = vector.extract_strided_slice %188 {offsets = [0, 17], sizes = [4, 239], strides = [1, 1]} : vector<4x256xf32> to vector<4x239xf32>
    %295 = vector.extract_strided_slice %188 {offsets = [0, 0], sizes = [4, 17], strides = [1, 1]} : vector<4x256xf32> to vector<4x17xf32>
    %296 = tpu.concatenate %294, %295 in 1 : vector<4x239xf32>, vector<4x17xf32> -> vector<4x256xf32>
    %c18_84 = arith.constant 18 : index
    %c0_85 = arith.constant 0 : index
    %297 = vector.load %arg4[%c18_84, %c0_85] : memref<25x256xf32, #tpu.memory_space<vmem>>, vector<1x256xf32>
    %298 = vector.broadcast %297 : vector<1x256xf32> to vector<4x256xf32>
    %299 = arith.mulf %296, %298 : vector<4x256xf32>
    %300 = vector.extract_strided_slice %188 {offsets = [0, 18], sizes = [4, 238], strides = [1, 1]} : vector<4x256xf32> to vector<4x238xf32>
    %301 = vector.extract_strided_slice %188 {offsets = [0, 0], sizes = [4, 18], strides = [1, 1]} : vector<4x256xf32> to vector<4x18xf32>
    %302 = tpu.concatenate %300, %301 in 1 : vector<4x238xf32>, vector<4x18xf32> -> vector<4x256xf32>
    %c19_86 = arith.constant 19 : index
    %c0_87 = arith.constant 0 : index
    %303 = vector.load %arg4[%c19_86, %c0_87] : memref<25x256xf32, #tpu.memory_space<vmem>>, vector<1x256xf32>
    %304 = vector.broadcast %303 : vector<1x256xf32> to vector<4x256xf32>
    %305 = arith.mulf %302, %304 : vector<4x256xf32>
    %306 = vector.extract_strided_slice %188 {offsets = [0, 30], sizes = [4, 226], strides = [1, 1]} : vector<4x256xf32> to vector<4x226xf32>
    %307 = vector.extract_strided_slice %188 {offsets = [0, 0], sizes = [4, 30], strides = [1, 1]} : vector<4x256xf32> to vector<4x30xf32>
    %308 = tpu.concatenate %306, %307 in 1 : vector<4x226xf32>, vector<4x30xf32> -> vector<4x256xf32>
    %c20_88 = arith.constant 20 : index
    %c0_89 = arith.constant 0 : index
    %309 = vector.load %arg4[%c20_88, %c0_89] : memref<25x256xf32, #tpu.memory_space<vmem>>, vector<1x256xf32>
    %310 = vector.broadcast %309 : vector<1x256xf32> to vector<4x256xf32>
    %311 = arith.mulf %308, %310 : vector<4x256xf32>
    %312 = vector.extract_strided_slice %188 {offsets = [0, 31], sizes = [4, 225], strides = [1, 1]} : vector<4x256xf32> to vector<4x225xf32>
    %313 = vector.extract_strided_slice %188 {offsets = [0, 0], sizes = [4, 31], strides = [1, 1]} : vector<4x256xf32> to vector<4x31xf32>
    %314 = tpu.concatenate %312, %313 in 1 : vector<4x225xf32>, vector<4x31xf32> -> vector<4x256xf32>
    %c21_90 = arith.constant 21 : index
    %c0_91 = arith.constant 0 : index
    %315 = vector.load %arg4[%c21_90, %c0_91] : memref<25x256xf32, #tpu.memory_space<vmem>>, vector<1x256xf32>
    %316 = vector.broadcast %315 : vector<1x256xf32> to vector<4x256xf32>
    %317 = arith.mulf %314, %316 : vector<4x256xf32>
    %318 = vector.extract_strided_slice %188 {offsets = [0, 32], sizes = [4, 224], strides = [1, 1]} : vector<4x256xf32> to vector<4x224xf32>
    %319 = vector.extract_strided_slice %188 {offsets = [0, 0], sizes = [4, 32], strides = [1, 1]} : vector<4x256xf32> to vector<4x32xf32>
    %320 = tpu.concatenate %318, %319 in 1 : vector<4x224xf32>, vector<4x32xf32> -> vector<4x256xf32>
    %c22_92 = arith.constant 22 : index
    %c0_93 = arith.constant 0 : index
    %321 = vector.load %arg4[%c22_92, %c0_93] : memref<25x256xf32, #tpu.memory_space<vmem>>, vector<1x256xf32>
    %322 = vector.broadcast %321 : vector<1x256xf32> to vector<4x256xf32>
    %323 = arith.mulf %320, %322 : vector<4x256xf32>
    %324 = vector.extract_strided_slice %188 {offsets = [0, 33], sizes = [4, 223], strides = [1, 1]} : vector<4x256xf32> to vector<4x223xf32>
    %325 = vector.extract_strided_slice %188 {offsets = [0, 0], sizes = [4, 33], strides = [1, 1]} : vector<4x256xf32> to vector<4x33xf32>
    %326 = tpu.concatenate %324, %325 in 1 : vector<4x223xf32>, vector<4x33xf32> -> vector<4x256xf32>
    %c23_94 = arith.constant 23 : index
    %c0_95 = arith.constant 0 : index
    %327 = vector.load %arg4[%c23_94, %c0_95] : memref<25x256xf32, #tpu.memory_space<vmem>>, vector<1x256xf32>
    %328 = vector.broadcast %327 : vector<1x256xf32> to vector<4x256xf32>
    %329 = arith.mulf %326, %328 : vector<4x256xf32>
    %330 = vector.extract_strided_slice %188 {offsets = [0, 34], sizes = [4, 222], strides = [1, 1]} : vector<4x256xf32> to vector<4x222xf32>
    %331 = vector.extract_strided_slice %188 {offsets = [0, 0], sizes = [4, 34], strides = [1, 1]} : vector<4x256xf32> to vector<4x34xf32>
    %332 = tpu.concatenate %330, %331 in 1 : vector<4x222xf32>, vector<4x34xf32> -> vector<4x256xf32>
    %c24_96 = arith.constant 24 : index
    %c0_97 = arith.constant 0 : index
    %333 = vector.load %arg4[%c24_96, %c0_97] : memref<25x256xf32, #tpu.memory_space<vmem>>, vector<1x256xf32>
    %334 = vector.broadcast %333 : vector<1x256xf32> to vector<4x256xf32>
    %335 = arith.mulf %332, %334 : vector<4x256xf32>
    %336 = tpu.concatenate %194, %200, %206, %212, %218, %224, %230, %236, %242, %248, %254, %260, %263, %269, %275, %281 in 0 : vector<4x256xf32>, vector<4x256xf32>, vector<4x256xf32>, vector<4x256xf32>, vector<4x256xf32>, vector<4x256xf32>, vector<4x256xf32>, vector<4x256xf32>, vector<4x256xf32>, vector<4x256xf32>, vector<4x256xf32>, vector<4x256xf32>, vector<4x256xf32>, vector<4x256xf32>, vector<4x256xf32>, vector<4x256xf32> -> vector<64x256xf32>
    %337 = tpu.concatenate %287, %293, %299, %305, %311, %317, %323, %329, %335 in 0 : vector<4x256xf32>, vector<4x256xf32>, vector<4x256xf32>, vector<4x256xf32>, vector<4x256xf32>, vector<4x256xf32>, vector<4x256xf32>, vector<4x256xf32>, vector<4x256xf32> -> vector<36x256xf32>
    %338 = tpu.concatenate %336, %337 in 0 : vector<64x256xf32>, vector<36x256xf32> -> vector<100x256xf32>
    %c0_98 = arith.constant 0 : index
    %c0_99 = arith.constant 0 : index
    %339 = vector.load %arg9[%c0_98, %c0_99] : memref<4x100xf32, #tpu.memory_space<vmem>>, vector<4x100xf32>
    %cst_100 = arith.constant dense<0.000000e+00> : vector<4x256xf32>
    %340 = tpu.matmul %339, %338, %cst_100 {dimension_numbers = #tpu.dot_dimension_numbers<[1], [0], [0], [1], [0, 0, 1, 1], [], []>} : vector<4x100xf32>, vector<100x256xf32>, vector<4x256xf32> -> vector<4x256xf32>
    %c0_101 = arith.constant 0 : index
    %c0_102 = arith.constant 0 : index
    %341 = vector.load %arg10[%c0_101, %c0_102] : memref<4x1xf32, #tpu.memory_space<vmem>>, vector<4x1xf32>
    %342 = vector.broadcast %341 : vector<4x1xf32> to vector<4x256xf32>
    %343 = arith.addf %340, %342 : vector<4x256xf32>
    %344 = vector.shape_cast %343 : vector<4x256xf32> to vector<1x4x256xf32>
    %cst_103 = arith.constant dense<0.000000e+00> : vector<1xf32>
    %345 = vector.multi_reduction <add>, %344, %cst_103 [1, 2] : vector<1x4x256xf32> to vector<1xf32>
    %346 = vector.shape_cast %345 : vector<1xf32> to vector<1x1x1xf32>
    %347 = vector.extract %346[0, 0, 0] : f32 from vector<1x1x1xf32>
    %cst_104 = arith.constant 1.024000e+03 : f32
    %348 = arith.divf %347, %cst_104 : f32
    %349 = arith.mulf %343, %343 : vector<4x256xf32>
    %350 = vector.shape_cast %349 : vector<4x256xf32> to vector<1x4x256xf32>
    %cst_105 = arith.constant dense<0.000000e+00> : vector<1xf32>
    %351 = vector.multi_reduction <add>, %350, %cst_105 [1, 2] : vector<1x4x256xf32> to vector<1xf32>
    %352 = vector.shape_cast %351 : vector<1xf32> to vector<1x1x1xf32>
    %353 = vector.extract %352[0, 0, 0] : f32 from vector<1x1x1xf32>
    %cst_106 = arith.constant 1.024000e+03 : f32
    %354 = arith.divf %353, %cst_106 : f32
    %355 = arith.mulf %348, %348 : f32
    %356 = arith.subf %354, %355 : f32
    %357 = vector.broadcast %348 : f32 to vector<4x256xf32>
    %358 = arith.subf %343, %357 : vector<4x256xf32>
    %cst_107 = arith.constant 9.99999974E-6 : f32
    %359 = arith.addf %356, %cst_107 : f32
    %360 = math.rsqrt %359 : f32
    %361 = vector.broadcast %360 : f32 to vector<4x256xf32>
    %362 = arith.mulf %358, %361 : vector<4x256xf32>
    %c0_108 = arith.constant 0 : index
    %c0_109 = arith.constant 0 : index
    %363 = vector.load %arg11[%c0_108, %c0_109] : memref<4x1xf32, #tpu.memory_space<vmem>>, vector<4x1xf32>
    %364 = vector.broadcast %363 : vector<4x1xf32> to vector<4x256xf32>
    %365 = arith.mulf %362, %364 : vector<4x256xf32>
    %c0_110 = arith.constant 0 : index
    %c0_111 = arith.constant 0 : index
    %366 = vector.load %arg12[%c0_110, %c0_111] : memref<4x1xf32, #tpu.memory_space<vmem>>, vector<4x1xf32>
    %367 = vector.broadcast %366 : vector<4x1xf32> to vector<4x256xf32>
    %368 = arith.addf %365, %367 : vector<4x256xf32>
    %cst_112 = arith.constant 0.000000e+00 : f32
    %369 = vector.broadcast %cst_112 : f32 to vector<4x256xf32>
    %370 = arith.maximumf %368, %369 : vector<4x256xf32>
    %371 = vector.shape_cast %370 : vector<4x256xf32> to vector<1x4x256xf32>
    %c0_113 = arith.constant 0 : index
    %c0_114 = arith.constant 0 : index
    %c0_115 = arith.constant 0 : index
    %372 = vector.load %arg13[%c0_113, %c0_114, %c0_115] : memref<1x4x256xf32, #tpu.memory_space<vmem>>, vector<1x4x256xf32>
    tpu.vector_store %arg13[%c0_113, %c0_114, %c0_115], %371 {strides = array<i32>} : memref<1x4x256xf32, #tpu.memory_space<vmem>>, vector<1x4x256xf32>,
    return
  }
  func.func @transform_0(%arg0: i32) -> (i32, i32, i32) {
    %c0_i32 = arith.constant 0 : i32
    %c0_i32_0 = arith.constant 0 : i32
    %c0_i32_1 = arith.constant 0 : i32
    return %arg0, %c0_i32, %c0_i32_0 : i32, i32, i32
  }
  func.func @transform_1(%arg0: i32) -> (i32, i32, i32) {
    %c0_i32 = arith.constant 0 : i32
    %c0_i32_0 = arith.constant 0 : i32
    %c0_i32_1 = arith.constant 0 : i32
    return %arg0, %c0_i32, %c0_i32_0 : i32, i32, i32
  }
  func.func @transform_2(%arg0: i32) -> (i32, i32) {
    %c0_i32 = arith.constant 0 : i32
    %c0_i32_0 = arith.constant 0 : i32
    %c0_i32_1 = arith.constant 0 : i32
    return %c0_i32, %c0_i32_0 : i32, i32
  }
  func.func @transform_3(%arg0: i32) -> (i32, i32) {
    %c0_i32 = arith.constant 0 : i32
    %c0_i32_0 = arith.constant 0 : i32
    %c0_i32_1 = arith.constant 0 : i32
    return %c0_i32, %c0_i32_0 : i32, i32
  }
  func.func @transform_4(%arg0: i32) -> (i32, i32) {
    %c0_i32 = arith.constant 0 : i32
    %c0_i32_0 = arith.constant 0 : i32
    %c0_i32_1 = arith.constant 0 : i32
    return %c0_i32, %c0_i32_0 : i32, i32
  }
  func.func @transform_5(%arg0: i32) -> (i32, i32) {
    %c0_i32 = arith.constant 0 : i32
    %c0_i32_0 = arith.constant 0 : i32
    %c0_i32_1 = arith.constant 0 : i32
    return %c0_i32, %c0_i32_0 : i32, i32
  }
  func.func @transform_6(%arg0: i32) -> (i32, i32) {
    %c0_i32 = arith.constant 0 : i32
    %c0_i32_0 = arith.constant 0 : i32
    %c0_i32_1 = arith.constant 0 : i32
    return %c0_i32, %c0_i32_0 : i32, i32
  }
  func.func @transform_7(%arg0: i32) -> (i32, i32) {
    %c0_i32 = arith.constant 0 : i32
    %c0_i32_0 = arith.constant 0 : i32
    %c0_i32_1 = arith.constant 0 : i32
    return %c0_i32, %c0_i32_0 : i32, i32
  }
  func.func @transform_8(%arg0: i32) -> (i32, i32) {
    %c0_i32 = arith.constant 0 : i32
    %c0_i32_0 = arith.constant 0 : i32
    %c0_i32_1 = arith.constant 0 : i32
    return %c0_i32, %c0_i32_0 : i32, i32
  }
  func.func @transform_9(%arg0: i32) -> (i32, i32) {
    %c0_i32 = arith.constant 0 : i32
    %c0_i32_0 = arith.constant 0 : i32
    %c0_i32_1 = arith.constant 0 : i32
    return %c0_i32, %c0_i32_0 : i32, i32
  }
  func.func @transform_10(%arg0: i32) -> (i32, i32) {
    %c0_i32 = arith.constant 0 : i32
    %c0_i32_0 = arith.constant 0 : i32
    %c0_i32_1 = arith.constant 0 : i32
    return %c0_i32, %c0_i32_0 : i32, i32
  }
  func.func @transform_11(%arg0: i32) -> (i32, i32) {
    %c0_i32 = arith.constant 0 : i32
    %c0_i32_0 = arith.constant 0 : i32
    %c0_i32_1 = arith.constant 0 : i32
    return %c0_i32, %c0_i32_0 : i32, i32
  }
  func.func @transform_12(%arg0: i32) -> (i32, i32, i32) {
    %c0_i32 = arith.constant 0 : i32
    %c0_i32_0 = arith.constant 0 : i32
    %c0_i32_1 = arith.constant 0 : i32
    return %arg0, %c0_i32, %c0_i32_0 : i32, i32, i32
  }
}

</mosaic_0001>

<llo_original>
// kernel: decoding_block_forward.1
$region0: #{decoding_block_forward.1}
  #allocation0 [shape = 'u32[]', space=smem, size = 0x4, offset = 0x4, fixed_abs, tag = 'smem constant byte address 0x4 - core index']
  #allocation1 [shape = 'u32[72,128]{1,0:T(1,128)}', space=vmem, size = 0x9000, scoped, tag = 'internal scratch']
  %s0 = inlined_call_operand.vmem [shape: f32[2,4,256], index: 0, kind: input, shape index: {}]
  %s1 = inlined_call_operand.vmem [shape: f32[2,4,64], index: 1, kind: input, shape index: {}]
  %s2 = inlined_call_operand.vmem [shape: f32[64,256], index: 2, kind: input, shape index: {}]
  %s3 = inlined_call_operand.vmem [shape: f32[25,256], index: 3, kind: input, shape index: {}]
  %s4 = inlined_call_operand.vmem [shape: f32[4,200], index: 4, kind: input, shape index: {}]
  %s5 = inlined_call_operand.vmem [shape: f32[4,1], index: 5, kind: input, shape index: {}]
  %s6 = inlined_call_operand.vmem [shape: f32[4,1], index: 6, kind: input, shape index: {}]
  %s7 = inlined_call_operand.vmem [shape: f32[4,1], index: 7, kind: input, shape index: {}]
  %s8 = inlined_call_operand.vmem [shape: f32[4,100], index: 8, kind: input, shape index: {}]
  %s9 = inlined_call_operand.vmem [shape: f32[4,1], index: 9, kind: input, shape index: {}]
  %s10 = inlined_call_operand.vmem [shape: f32[4,1], index: 10, kind: input, shape index: {}]
  %s11 = inlined_call_operand.vmem [shape: f32[4,1], index: 11, kind: input, shape index: {}]
  %s12 = inlined_call_operand.vmem [shape: f32[2,4,256], index: 12, kind: output, shape index: {}]
  %s13 = sld [smem:[#allocation0]]
  $region81: #{decoding_block_forward.1} parent=0
    _
  %s15 = ssub.s32 1, %s13
  %s16 = scalar_select 0, %s15, %s13
  loop: start=0, step=1, limit=4
  $region2: #{decoding_block_forward.1} parent=0 // loop_pre_header
    _
  $region3: #{decoding_block_forward.1} parent=0 // loop_header
    %s18 = sphi 0, %s22
    %p19 = scmp.ge.s32.totalorder %s18, 4
    %s28 = sphi 0, %s30
    %s31 = sphi 0, %s28
    %s32 = sphi 0, %s31
    %s48 = sphi 0, %s32
    %s54 = sphi 0, %s56
    %s57 = sphi 0, %s54
    %s58 = sphi 0, %s57
    %s74 = sphi 0, %s58
    %s78 = sphi 0, %s78
    %s80 = sphi 0, %s78
    %s81 = sphi 0, %s80
    %s95 = sphi 0, %s81
    %s99 = sphi 0, %s99
    %s101 = sphi 0, %s99
    %s102 = sphi 0, %s101
    %s116 = sphi 0, %s102
    %s120 = sphi 0, %s120
    %s122 = sphi 0, %s120
    %s123 = sphi 0, %s122
    %s137 = sphi 0, %s123
    %s141 = sphi 0, %s141
    %s143 = sphi 0, %s141
    %s144 = sphi 0, %s143
    %s158 = sphi 0, %s144
    %s162 = sphi 0, %s162
    %s164 = sphi 0, %s162
    %s165 = sphi 0, %s164
    %s179 = sphi 0, %s165
    %s183 = sphi 0, %s183
    %s185 = sphi 0, %s183
    %s186 = sphi 0, %s185
    %s200 = sphi 0, %s186
    %s204 = sphi 0, %s204
    %s206 = sphi 0, %s204
    %s207 = sphi 0, %s206
    %s221 = sphi 0, %s207
    %s225 = sphi 0, %s225
    %s227 = sphi 0, %s225
    %s228 = sphi 0, %s227
    %s242 = sphi 0, %s228
    %s246 = sphi 0, %s246
    %s248 = sphi 0, %s246
    %s249 = sphi 0, %s248
    %s263 = sphi 0, %s249
    %s267 = sphi 0, %s267
    %s269 = sphi 0, %s267
    %s270 = sphi 0, %s269
    %s284 = sphi 0, %s270
    %s290 = sphi 0, %s292
    %s293 = sphi 0, %s290
    %s294 = sphi 0, %s293
    %s310 = sphi 0, %s294
  $region4: #{decoding_block_forward.1} parent=0 // loop_header_branch
    %21 = sbr.rel (%p19) target = $region8
  $region5: #{decoding_block_forward.1} parent=0 // loop_body
    %s23 = ssub.s32 %s18, 1
    %s24 = ssub.s32 %s18, 2
    %s25 = sadd.s32 %s18, 1
    %s26 = ssub.s32 %s18, %s25
    %p27 = scmp.eq.s32.totalorder %s26, 0
    %s29 = sadd.s32 %s28, 1
    %s30 = scalar_select %p27, %s28, %s29
    %p33 = pneg %p27
    %p34 = scmp.eq.s32.totalorder %s18, 1
    %p35 = por %p33, %p34
    %p36 = scmp.ne.s32.totalorder %s28, %s31
    %p37 = scmp.eq.s32.totalorder %s18, 0
    %p38 = por %p36, %p37
    %p39 = scmp.ne.s32.totalorder %s28, %s31
    %p40 = scmp.eq.s32.totalorder %s23, 1
    %p41 = por %p39, %p40
    %p42 = scmp.ne.s32.totalorder %s31, %s32
    %p43 = scmp.eq.s32.totalorder %s23, 0
    %p44 = por %p42, %p43
    %p45 = scmp.ne.s32.totalorder %s31, %s32
    %p46 = scmp.eq.s32.totalorder %s24, 1
    %p47 = por %p45, %p46
    %p49 = scmp.ne.s32.totalorder %s32, %s48
    %p50 = scmp.eq.s32.totalorder %s24, 0
    %p51 = por %p49, %p50
    %s52 = ssub.s32 %s18, %s25
    %p53 = scmp.eq.s32.totalorder %s52, 0
    %s55 = sadd.s32 %s54, 1
    %s56 = scalar_select %p53, %s54, %s55
    %p59 = pneg %p53
    %p60 = scmp.eq.s32.totalorder %s18, 1
    %p61 = por %p59, %p60
    %p62 = scmp.ne.s32.totalorder %s54, %s57
    %p63 = scmp.eq.s32.totalorder %s18, 0
    %p64 = por %p62, %p63
    %p65 = scmp.ne.s32.totalorder %s54, %s57
    %p66 = scmp.eq.s32.totalorder %s23, 1
    %p67 = por %p65, %p66
    %p68 = scmp.ne.s32.totalorder %s57, %s58
    %p69 = scmp.eq.s32.totalorder %s23, 0
    %p70 = por %p68, %p69
    %p71 = scmp.ne.s32.totalorder %s57, %s58
    %p72 = scmp.eq.s32.totalorder %s24, 1
    %p73 = por %p71, %p72
    %p75 = scmp.ne.s32.totalorder %s58, %s74
    %p76 = scmp.eq.s32.totalorder %s24, 0
    %p77 = por %p75, %p76
    %s79 = sadd.s32 %s78, 1
    %p82 = scmp.eq.s32.totalorder %s18, 1
    %p83 = scmp.ne.s32.totalorder %s78, %s80
    %p84 = scmp.eq.s32.totalorder %s18, 0
    %p85 = por %p83, %p84
    %p86 = scmp.ne.s32.totalorder %s78, %s80
    %p87 = scmp.eq.s32.totalorder %s23, 1
    %p88 = por %p86, %p87
    %p89 = scmp.ne.s32.totalorder %s80, %s81
    %p90 = scmp.eq.s32.totalorder %s23, 0
    %p91 = por %p89, %p90
    %p92 = scmp.ne.s32.totalorder %s80, %s81
    %p93 = scmp.eq.s32.totalorder %s24, 1
    %p94 = por %p92, %p93
    %p96 = scmp.ne.s32.totalorder %s81, %s95
    %p97 = scmp.eq.s32.totalorder %s24, 0
    %p98 = por %p96, %p97
    %s100 = sadd.s32 %s99, 1
    %p103 = scmp.eq.s32.totalorder %s18, 1
    %p104 = scmp.ne.s32.totalorder %s99, %s101
    %p105 = scmp.eq.s32.totalorder %s18, 0
    %p106 = por %p104, %p105
    %p107 = scmp.ne.s32.totalorder %s99, %s101
    %p108 = scmp.eq.s32.totalorder %s23, 1
    %p109 = por %p107, %p108
    %p110 = scmp.ne.s32.totalorder %s101, %s102
    %p111 = scmp.eq.s32.totalorder %s23, 0
    %p112 = por %p110, %p111
    %p113 = scmp.ne.s32.totalorder %s101, %s102
    %p114 = scmp.eq.s32.totalorder %s24, 1
    %p115 = por %p113, %p114
    %p117 = scmp.ne.s32.totalorder %s102, %s116
    %p118 = scmp.eq.s32.totalorder %s24, 0
    %p119 = por %p117, %p118
    %s121 = sadd.s32 %s120, 1
    %p124 = scmp.eq.s32.totalorder %s18, 1
    %p125 = scmp.ne.s32.totalorder %s120, %s122
    %p126 = scmp.eq.s32.totalorder %s18, 0
    %p127 = por %p125, %p126
    %p128 = scmp.ne.s32.totalorder %s120, %s122
    %p129 = scmp.eq.s32.totalorder %s23, 1
    %p130 = por %p128, %p129
    %p131 = scmp.ne.s32.totalorder %s122, %s123
    %p132 = scmp.eq.s32.totalorder %s23, 0
    %p133 = por %p131, %p132
    %p134 = scmp.ne.s32.totalorder %s122, %s123
    %p135 = scmp.eq.s32.totalorder %s24, 1
    %p136 = por %p134, %p135
    %p138 = scmp.ne.s32.totalorder %s123, %s137
    %p139 = scmp.eq.s32.totalorder %s24, 0
    %p140 = por %p138, %p139
    %s142 = sadd.s32 %s141, 1
    %p145 = scmp.eq.s32.totalorder %s18, 1
    %p146 = scmp.ne.s32.totalorder %s141, %s143
    %p147 = scmp.eq.s32.totalorder %s18, 0
    %p148 = por %p146, %p147
    %p149 = scmp.ne.s32.totalorder %s141, %s143
    %p150 = scmp.eq.s32.totalorder %s23, 1
    %p151 = por %p149, %p150
    %p152 = scmp.ne.s32.totalorder %s143, %s144
    %p153 = scmp.eq.s32.totalorder %s23, 0
    %p154 = por %p152, %p153
    %p155 = scmp.ne.s32.totalorder %s143, %s144
    %p156 = scmp.eq.s32.totalorder %s24, 1
    %p157 = por %p155, %p156
    %p159 = scmp.ne.s32.totalorder %s144, %s158
    %p160 = scmp.eq.s32.totalorder %s24, 0
    %p161 = por %p159, %p160
    %s163 = sadd.s32 %s162, 1
    %p166 = scmp.eq.s32.totalorder %s18, 1
    %p167 = scmp.ne.s32.totalorder %s162, %s164
    %p168 = scmp.eq.s32.totalorder %s18, 0
    %p169 = por %p167, %p168
    %p170 = scmp.ne.s32.totalorder %s162, %s164
    %p171 = scmp.eq.s32.totalorder %s23, 1
    %p172 = por %p170, %p171
    %p173 = scmp.ne.s32.totalorder %s164, %s165
    %p174 = scmp.eq.s32.totalorder %s23, 0
    %p175 = por %p173, %p174
    %p176 = scmp.ne.s32.totalorder %s164, %s165
    %p177 = scmp.eq.s32.totalorder %s24, 1
    %p178 = por %p176, %p177
    %p180 = scmp.ne.s32.totalorder %s165, %s179
    %p181 = scmp.eq.s32.totalorder %s24, 0
    %p182 = por %p180, %p181
    %s184 = sadd.s32 %s183, 1
    %p187 = scmp.eq.s32.totalorder %s18, 1
    %p188 = scmp.ne.s32.totalorder %s183, %s185
    %p189 = scmp.eq.s32.totalorder %s18, 0
    %p190 = por %p188, %p189
    %p191 = scmp.ne.s32.totalorder %s183, %s185
    %p192 = scmp.eq.s32.totalorder %s23, 1
    %p193 = por %p191, %p192
    %p194 = scmp.ne.s32.totalorder %s185, %s186
    %p195 = scmp.eq.s32.totalorder %s23, 0
    %p196 = por %p194, %p195
    %p197 = scmp.ne.s32.totalorder %s185, %s186
    %p198 = scmp.eq.s32.totalorder %s24, 1
    %p199 = por %p197, %p198
    %p201 = scmp.ne.s32.totalorder %s186, %s200
    %p202 = scmp.eq.s32.totalorder %s24, 0
    %p203 = por %p201, %p202
    %s205 = sadd.s32 %s204, 1
    %p208 = scmp.eq.s32.totalorder %s18, 1
    %p209 = scmp.ne.s32.totalorder %s204, %s206
    %p210 = scmp.eq.s32.totalorder %s18, 0
    %p211 = por %p209, %p210
    %p212 = scmp.ne.s32.totalorder %s204, %s206
    %p213 = scmp.eq.s32.totalorder %s23, 1
    %p214 = por %p212, %p213
    %p215 = scmp.ne.s32.totalorder %s206, %s207
    %p216 = scmp.eq.s32.totalorder %s23, 0
    %p217 = por %p215, %p216
    %p218 = scmp.ne.s32.totalorder %s206, %s207
    %p219 = scmp.eq.s32.totalorder %s24, 1
    %p220 = por %p218, %p219
    %p222 = scmp.ne.s32.totalorder %s207, %s221
    %p223 = scmp.eq.s32.totalorder %s24, 0
    %p224 = por %p222, %p223
    %s226 = sadd.s32 %s225, 1
    %p229 = scmp.eq.s32.totalorder %s18, 1
    %p230 = scmp.ne.s32.totalorder %s225, %s227
    %p231 = scmp.eq.s32.totalorder %s18, 0
    %p232 = por %p230, %p231
    %p233 = scmp.ne.s32.totalorder %s225, %s227
    %p234 = scmp.eq.s32.totalorder %s23, 1
    %p235 = por %p233, %p234
    %p236 = scmp.ne.s32.totalorder %s227, %s228
    %p237 = scmp.eq.s32.totalorder %s23, 0
    %p238 = por %p236, %p237
    %p239 = scmp.ne.s32.totalorder %s227, %s228
    %p240 = scmp.eq.s32.totalorder %s24, 1
    %p241 = por %p239, %p240
    %p243 = scmp.ne.s32.totalorder %s228, %s242
    %p244 = scmp.eq.s32.totalorder %s24, 0
    %p245 = por %p243, %p244
    %s247 = sadd.s32 %s246, 1
    %p250 = scmp.eq.s32.totalorder %s18, 1
    %p251 = scmp.ne.s32.totalorder %s246, %s248
    %p252 = scmp.eq.s32.totalorder %s18, 0
    %p253 = por %p251, %p252
    %p254 = scmp.ne.s32.totalorder %s246, %s248
    %p255 = scmp.eq.s32.totalorder %s23, 1
    %p256 = por %p254, %p255
    %p257 = scmp.ne.s32.totalorder %s248, %s249
    %p258 = scmp.eq.s32.totalorder %s23, 0
    %p259 = por %p257, %p258
    %p260 = scmp.ne.s32.totalorder %s248, %s249
    %p261 = scmp.eq.s32.totalorder %s24, 1
    %p262 = por %p260, %p261
    %p264 = scmp.ne.s32.totalorder %s249, %s263
    %p265 = scmp.eq.s32.totalorder %s24, 0
    %p266 = por %p264, %p265
    %s268 = sadd.s32 %s267, 1
    %p271 = scmp.eq.s32.totalorder %s18, 1
    %p272 = scmp.ne.s32.totalorder %s267, %s269
    %p273 = scmp.eq.s32.totalorder %s18, 0
    %p274 = por %p272, %p273
    %p275 = scmp.ne.s32.totalorder %s267, %s269
    %p276 = scmp.eq.s32.totalorder %s23, 1
    %p277 = por %p275, %p276
    %p278 = scmp.ne.s32.totalorder %s269, %s270
    %p279 = scmp.eq.s32.totalorder %s23, 0
    %p280 = por %p278, %p279
    %p281 = scmp.ne.s32.totalorder %s269, %s270
    %p282 = scmp.eq.s32.totalorder %s24, 1
    %p283 = por %p281, %p282
    %p285 = scmp.ne.s32.totalorder %s270, %s284
    %p286 = scmp.eq.s32.totalorder %s24, 0
    %p287 = por %p285, %p286
    %s288 = ssub.s32 %s18, %s25
    %p289 = scmp.eq.s32.totalorder %s288, 0
    %s291 = sadd.s32 %s290, 1
    %s292 = scalar_select %p289, %s290, %s291
    %p295 = pneg %p289
    %p296 = scmp.eq.s32.totalorder %s18, 1
    %p297 = por %p295, %p296
    %p298 = scmp.ne.s32.totalorder %s290, %s293
    %p299 = scmp.eq.s32.totalorder %s18, 0
    %p300 = por %p298, %p299
    %p301 = scmp.ne.s32.totalorder %s290, %s293
    %p302 = scmp.eq.s32.totalorder %s23, 1
    %p303 = por %p301, %p302
    %p304 = scmp.ne.s32.totalorder %s293, %s294
    %p305 = scmp.eq.s32.totalorder %s23, 0
    %p306 = por %p304, %p305
    %p307 = scmp.ne.s32.totalorder %s293, %s294
    %p308 = scmp.eq.s32.totalorder %s24, 1
    %p309 = por %p307, %p308
    %p311 = scmp.ne.s32.totalorder %s294, %s310
    %p312 = scmp.eq.s32.totalorder %s24, 0
    %p313 = por %p311, %p312
    %p314 = scmp.le.s32.totalorder 1, %s18
    %p315 = scmp.lt.s32.totalorder %s18, 3
    %p316 = pnand %p314, %p315
    %p317 = pneg %p316
    // Predicated region
    $region9: #{decoding_block_forward.1} parent=5 // pred_check
      _
    $region10: #{decoding_block_forward.1} parent=5 // pred_check_branch
      %319 = sbr.rel (%p316) target = $region12
    $region11: #{decoding_block_forward.1} parent=5 // pred_region
      %s320 = ssub.s32 %s18, 1
      // Predicated region
      $region13: #{decoding_block_forward.1} parent=11 // pred_check
        %p321 = pneg %p91
      $region14: #{decoding_block_forward.1} parent=11 // pred_check_branch
        %323 = sbr.rel (%p321) target = $region16
      $region15: #{decoding_block_forward.1} parent=11 // pred_region
        _
      $region16: #{decoding_block_forward.1} parent=11 // pred_fallthru
        _
      // Predicated region
      $region17: #{decoding_block_forward.1} parent=11 // pred_check
        %p324 = pneg %p112
      $region18: #{decoding_block_forward.1} parent=11 // pred_check_branch
        %326 = sbr.rel (%p324) target = $region20
      $region19: #{decoding_block_forward.1} parent=11 // pred_region
        _
      $region20: #{decoding_block_forward.1} parent=11 // pred_fallthru
        _
      // Predicated region
      $region21: #{decoding_block_forward.1} parent=11 // pred_check
        %p327 = pneg %p133
      $region22: #{decoding_block_forward.1} parent=11 // pred_check_branch
        %329 = sbr.rel (%p327) target = $region24
      $region23: #{decoding_block_forward.1} parent=11 // pred_region
        _
      $region24: #{decoding_block_forward.1} parent=11 // pred_fallthru
        _
      // Predicated region
      $region25: #{decoding_block_forward.1} parent=11 // pred_check
        %p330 = pneg %p154
      $region26: #{decoding_block_forward.1} parent=11 // pred_check_branch
        %332 = sbr.rel (%p330) target = $region28
      $region27: #{decoding_block_forward.1} parent=11 // pred_region
        _
      $region28: #{decoding_block_forward.1} parent=11 // pred_fallthru
        _
      // Predicated region
      $region29: #{decoding_block_forward.1} parent=11 // pred_check
        %p333 = pneg %p175
      $region30: #{decoding_block_forward.1} parent=11 // pred_check_branch
        %335 = sbr.rel (%p333) target = $region32
      $region31: #{decoding_block_forward.1} parent=11 // pred_region
        _
      $region32: #{decoding_block_forward.1} parent=11 // pred_fallthru
        _
      // Predicated region
      $region33: #{decoding_block_forward.1} parent=11 // pred_check
        %p336 = pneg %p196
      $region34: #{decoding_block_forward.1} parent=11 // pred_check_branch
        %338 = sbr.rel (%p336) target = $region36
      $region35: #{decoding_block_forward.1} parent=11 // pred_region
        _
      $region36: #{decoding_block_forward.1} parent=11 // pred_fallthru
        _
      // Predicated region
      $region37: #{decoding_block_forward.1} parent=11 // pred_check
        %p339 = pneg %p217
      $region38: #{decoding_block_forward.1} parent=11 // pred_check_branch
        %341 = sbr.rel (%p339) target = $region40
      $region39: #{decoding_block_forward.1} parent=11 // pred_region
        _
      $region40: #{decoding_block_forward.1} parent=11 // pred_fallthru
        _
      // Predicated region
      $region41: #{decoding_block_forward.1} parent=11 // pred_check
        %p342 = pneg %p238
      $region42: #{decoding_block_forward.1} parent=11 // pred_check_branch
        %344 = sbr.rel (%p342) target = $region44
      $region43: #{decoding_block_forward.1} parent=11 // pred_region
        _
      $region44: #{decoding_block_forward.1} parent=11 // pred_fallthru
        _
      // Predicated region
      $region45: #{decoding_block_forward.1} parent=11 // pred_check
        %p345 = pneg %p259
      $region46: #{decoding_block_forward.1} parent=11 // pred_check_branch
        %347 = sbr.rel (%p345) target = $region48
      $region47: #{decoding_block_forward.1} parent=11 // pred_region
        _
      $region48: #{decoding_block_forward.1} parent=11 // pred_fallthru
        _
      // Predicated region
      $region49: #{decoding_block_forward.1} parent=11 // pred_check
        %p348 = pneg %p280
      $region50: #{decoding_block_forward.1} parent=11 // pred_check_branch
        %350 = sbr.rel (%p348) target = $region52
      $region51: #{decoding_block_forward.1} parent=11 // pred_region
        _
      $region52: #{decoding_block_forward.1} parent=11 // pred_fallthru
        _
    $region12: #{decoding_block_forward.1} parent=5 // pred_fallthru
      _
    %p351 = scmp.lt.s32.totalorder %s18, 2
    // Predicated region
    $region53: #{decoding_block_forward.1} parent=5 // pred_check
      %p352 = pneg %p351
    $region54: #{decoding_block_forward.1} parent=5 // pred_check_branch
      %354 = sbr.rel (%p352) target = $region56
    $region55: #{decoding_block_forward.1} parent=5 // pred_region
      // Predicated region
      $region57: #{decoding_block_forward.1} parent=55 // pred_check
        %p355 = pneg %p38
      $region58: #{decoding_block_forward.1} parent=55 // pred_check_branch
        %357 = sbr.rel (%p355) target = $region60
      $region59: #{decoding_block_forward.1} parent=55 // pred_region
        %p358 = scmp.lt.s32.totalorder %s18, 1
        %s359 = scalar_select %p358, %s18, 1
        %s360 = smul.addr %s359, 2
        %s361 = smul.addr %s360, 4
        %s362 = scalar_lea.vmem %s0, %s361
      $region60: #{decoding_block_forward.1} parent=55 // pred_fallthru
        _
      // Predicated region
      $region61: #{decoding_block_forward.1} parent=55 // pred_check
        %p363 = pneg %p64
      $region62: #{decoding_block_forward.1} parent=55 // pred_check_branch
        %365 = sbr.rel (%p363) target = $region64
      $region63: #{decoding_block_forward.1} parent=55 // pred_region
        %p366 = scmp.lt.s32.totalorder %s18, 1
        %s367 = scalar_select %p366, %s18, 1
        %s368 = smul.addr %s367, 4
        %s369 = scalar_lea.vmem %s1, %s368
      $region64: #{decoding_block_forward.1} parent=55 // pred_fallthru
        _
    $region56: #{decoding_block_forward.1} parent=5 // pred_fallthru
      _
    %p370 = scmp.le.s32.totalorder 1, %s18
    %p371 = scmp.lt.s32.totalorder %s18, 3
    %p372 = pnand %p370, %p371
    %p373 = pneg %p372
    // Predicated region
    $region65: #{decoding_block_forward.1} parent=5 // pred_check
      _
    $region66: #{decoding_block_forward.1} parent=5 // pred_check_branch
      %375 = sbr.rel (%p372) target = $region68
    $region67: #{decoding_block_forward.1} parent=5 // pred_region
      %s376 = ssub.s32 %s18, 1
      %p377 = scmp.lt.s32.totalorder %s23, 1
      %s378 = scalar_select %p377, %s23, 1
      %s379 = smul.addr %s378, 2
      %s380 = smul.addr %s379, 4
      %s381 = scalar_lea.vmem %s0, %s380
      %p382 = pneg %p44
      %p383 = pneg %p41
      %p384 = scmp.lt.s32.totalorder %s23, 1
      %s385 = scalar_select %p384, %s23, 1
      %s386 = smul.addr %s385, 4
      %s387 = scalar_lea.vmem %s1, %s386
      %p388 = pneg %p70
      %p389 = pneg %p67
      %p390 = pneg %p91
      %p391 = pneg %p88
      %p392 = pneg %p112
      %p393 = pneg %p109
      %p394 = pneg %p133
      %p395 = pneg %p130
      %p396 = pneg %p154
      %p397 = pneg %p151
      %p398 = pneg %p175
      %p399 = pneg %p172
      %p400 = pneg %p196
      %p401 = pneg %p193
      %p402 = pneg %p217
      %p403 = pneg %p214
      %p404 = pneg %p238
      %p405 = pneg %p235
      %p406 = pneg %p259
      %p407 = pneg %p256
      %p408 = pneg %p280
      %p409 = pneg %p277
      %p410 = pneg %p306
      %p411 = pneg %p303
      %p412 = scmp.lt.s32.totalorder %s23, 1
      %s413 = scalar_select %p412, %s23, 1
      %s414 = smul.addr %s413, 2
      %s415 = smul.addr %s414, 4
      %s416 = scalar_lea.vmem %s12, %s415
      %p417 = scmp.lt.s32.totalorder %s23, 1
      %s418 = scalar_select %p417, %s23, 1
      %s419 = smul.addr %s418, 2
      %s420 = smul.addr %s419, 4
      %s421 = scalar_lea.vmem %s0, %s420
      %p422 = scmp.lt.s32.totalorder %s23, 1
      %s423 = scalar_select %p422, %s23, 1
      %s424 = smul.addr %s423, 4
      %s425 = scalar_lea.vmem %s1, %s424
      %p426 = scmp.lt.s32.totalorder %s23, 1
      %s427 = scalar_select %p426, %s23, 1
      %s428 = smul.addr %s427, 2
      %s429 = smul.addr %s428, 4
      %s430 = scalar_lea.vmem %s12, %s429
      %v431 = vld [vmem:[%s425] sm:$0xf]
      %v432 = vld [vmem:[%s2] sm:$0xff]
      %v433 = vld [vmem:[%s2 + $0x8] sm:$0xff]
      %v434 = vld [vmem:[%s2 + $0x10] sm:$0xff]
      %v435 = vld [vmem:[%s2 + $0x18] sm:$0xff]
      %v436 = vld [vmem:[%s2 + $0x20] sm:$0xff]
      %v437 = vld [vmem:[%s2 + $0x28] sm:$0xff]
      %v438 = vld [vmem:[%s2 + $0x30] sm:$0xff]
      %v439 = vld [vmem:[%s2 + $0x38] sm:$0xff]
      %v440 = vld [vmem:[%s2 + $0x40] sm:$0xff]
      %v441 = vld [vmem:[%s2 + $0x48] sm:$0xff]
      %v442 = vld [vmem:[%s2 + $0x50] sm:$0xff]
      %v443 = vld [vmem:[%s2 + $0x58] sm:$0xff]
      %v444 = vld [vmem:[%s2 + $0x60] sm:$0xff]
      %v445 = vld [vmem:[%s2 + $0x68] sm:$0xff]
      %v446 = vld [vmem:[%s2 + $0x70] sm:$0xff]
      %v447 = vld [vmem:[%s2 + $0x78] sm:$0xff]
      %vm448 = vcmask 523264
      %v450 = vsel %vm448, %v431, 0
      %452 = vmatpush.msra.mxu0 0.0
      %453 = vmatpush.msra.mxu0 0.0
      %454 = vmatpush.msra.mxu0 0.0
      %455 = vmatpush.msra.mxu0 0.0
      %456 = vmatpush.msra.mxu0 0.0
      %457 = vmatpush.msra.mxu0 0.0
      %458 = vmatpush.msra.mxu0 0.0
      %459 = vmatpush.msra.mxu0 0.0
      %460 = vmatpush.msra.mxu0 %v446
      %461 = vmatpush.msra.mxu0 %v444
      %462 = vmatpush.msra.mxu0 %v442
      %463 = vmatpush.msra.mxu0 %v440
      %464 = vmatpush.msra.mxu0 %v438
      %465 = vmatpush.msra.mxu0 %v436
      %466 = vmatpush.msra.mxu0 %v434
      %467 = vmatpush.msra.mxu0 %v432
      %468 = vmatmul.f32.gmra.mxu0 %v450
      %v469 = vpop.f32.mrf.mxu0
      %v470 = vadd.f32 0.0, %v469
      %471 = vdwg.mxu0
      %472 = vmatpush.msra.mxu0 0.0
      %473 = vmatpush.msra.mxu0 0.0
      %474 = vmatpush.msra.mxu0 0.0
      %475 = vmatpush.msra.mxu0 0.0
      %476 = vmatpush.msra.mxu0 0.0
      %477 = vmatpush.msra.mxu0 0.0
      %478 = vmatpush.msra.mxu0 0.0
      %479 = vmatpush.msra.mxu0 0.0
      %480 = vmatpush.msra.mxu0 %v447
      %481 = vmatpush.msra.mxu0 %v445
      %482 = vmatpush.msra.mxu0 %v443
      %483 = vmatpush.msra.mxu0 %v441
      %484 = vmatpush.msra.mxu0 %v439
      %485 = vmatpush.msra.mxu0 %v437
      %486 = vmatpush.msra.mxu0 %v435
      %487 = vmatpush.msra.mxu0 %v433
      %488 = vmatmul.f32.gmra.mxu0 %v450
      %v489 = vpop.f32.mrf.mxu0
      %v490 = vadd.f32 0.0, %v489
      %491 = vdwg.mxu0
      %v492 = vld [vmem:[%s421] sm:$0xff]
      %494 = vst [vmem:[#allocation1] ss:$2 sm:$0xff] %v492
      %v495 = vld.sshfl [vmem:[#allocation1] sm:$0xff pattern:$0x75316420]
      %v496 = vld.sshfl [vmem:[#allocation1 + $0x8] sm:$0xff pattern:$0x75316420]
      %v501 = vrot.slane %v470, 4
      %v502 = vrot.slane %v490, 4
      %vm505 = vcmask 1043456
      %v506 = vsel %vm505, %v495, %v501
      %v507 = vsel %vm505, %v496, %v502
      %509 = vrot.lane.b32.xlu0 %v507, 34
      %v510 = vpop.permute.xlu0 %509
      %513 = vrot.lane.b32.xlu0 %v506, 34
      %v514 = vpop.permute.xlu0 %513
      %vm515 = vcmask 277504
      %v516 = vsel %vm515, %v514, %v510
      %v519 = vsel %vm515, %v510, %v514
      %v520 = vld [vmem:[%s3] ss:$8 sm:$0x3]
      %v522 = vperm.slane %v520, 0
      %v523 = vperm.slane %v520, 1
      %v526 = vmul.f32 %v519, %v522
      %v527 = vmul.f32 %v516, %v523
      %528 = vrot.lane.b32.xlu0 %v507, 33
      %v529 = vpop.permute.xlu0 %528
      %531 = vrot.lane.b32.xlu0 %v506, 33
      %v532 = vpop.permute.xlu0 %531
      %vm533 = vcmask 269312
      %v534 = vsel %vm533, %v532, %v529
      %v537 = vsel %vm533, %v529, %v532
      %s538 = scalar_lea.vmem %s3, 1
      %v539 = vld [vmem:[%s538] ss:$8 sm:$0x3]
      %v541 = vperm.slane %v539, 0
      %v542 = vperm.slane %v539, 1
      %v545 = vmul.f32 %v537, %v541
      %v546 = vmul.f32 %v534, %v542
      %547 = vrot.lane.b32.xlu0 %v507, 32
      %v548 = vpop.permute.xlu0 %547
      %550 = vrot.lane.b32.xlu0 %v506, 32
      %v551 = vpop.permute.xlu0 %550
      %vm552 = vcmask 261120
      %v553 = vsel %vm552, %v551, %v548
      %v556 = vsel %vm552, %v548, %v551
      %s557 = scalar_lea.vmem %s3, 2
      %v558 = vld [vmem:[%s557] ss:$8 sm:$0x3]
      %v560 = vperm.slane %v558, 0
      %v561 = vperm.slane %v558, 1
      %v564 = vmul.f32 %v556, %v560
      %v565 = vmul.f32 %v553, %v561
      %566 = vrot.lane.b32.xlu0 %v507, 31
      %v567 = vpop.permute.xlu0 %566
      %569 = vrot.lane.b32.xlu0 %v506, 31
      %v570 = vpop.permute.xlu0 %569
      %vm571 = vcmask 252928
      %v572 = vsel %vm571, %v570, %v567
      %v575 = vsel %vm571, %v567, %v570
      %s576 = scalar_lea.vmem %s3, 3
      %v577 = vld [vmem:[%s576] ss:$8 sm:$0x3]
      %v579 = vperm.slane %v577, 0
      %v580 = vperm.slane %v577, 1
      %v583 = vmul.f32 %v575, %v579
      %v584 = vmul.f32 %v572, %v580
      %585 = vrot.lane.b32.xlu0 %v507, 30
      %v586 = vpop.permute.xlu0 %585
      %588 = vrot.lane.b32.xlu0 %v506, 30
      %v589 = vpop.permute.xlu0 %588
      %vm590 = vcmask 244736
      %v591 = vsel %vm590, %v589, %v586
      %v594 = vsel %vm590, %v586, %v589
      %s595 = scalar_lea.vmem %s3, 4
      %v596 = vld [vmem:[%s595] ss:$8 sm:$0x3]
      %v598 = vperm.slane %v596, 0
      %v599 = vperm.slane %v596, 1
      %v602 = vmul.f32 %v594, %v598
      %v603 = vmul.f32 %v591, %v599
      %604 = vrot.lane.b32.xlu0 %v507, 18
      %v605 = vpop.permute.xlu0 %604
      %607 = vrot.lane.b32.xlu0 %v506, 18
      %v608 = vpop.permute.xlu0 %607
      %vm609 = vcmask 146432
      %v610 = vsel %vm609, %v608, %v605
      %v613 = vsel %vm609, %v605, %v608
      %s614 = scalar_lea.vmem %s3, 5
      %v615 = vld [vmem:[%s614] ss:$8 sm:$0x3]
      %v617 = vperm.slane %v615, 0
      %v618 = vperm.slane %v615, 1
      %v621 = vmul.f32 %v613, %v617
      %v622 = vmul.f32 %v610, %v618
      %623 = vrot.lane.b32.xlu0 %v507, 17
      %v624 = vpop.permute.xlu0 %623
      %626 = vrot.lane.b32.xlu0 %v506, 17
      %v627 = vpop.permute.xlu0 %626
      %vm628 = vcmask 138240
      %v629 = vsel %vm628, %v627, %v624
      %v632 = vsel %vm628, %v624, %v627
      %s633 = scalar_lea.vmem %s3, 6
      %v634 = vld [vmem:[%s633] ss:$8 sm:$0x3]
      %v636 = vperm.slane %v634, 0
      %v637 = vperm.slane %v634, 1
      %v640 = vmul.f32 %v632, %v636
      %v641 = vmul.f32 %v629, %v637
      %642 = vrot.lane.b32.xlu0 %v507, 16
      %v643 = vpop.permute.xlu0 %642
      %645 = vrot.lane.b32.xlu0 %v506, 16
      %v646 = vpop.permute.xlu0 %645
      %vm647 = vcmask 130048
      %v648 = vsel %vm647, %v646, %v643
      %v651 = vsel %vm647, %v643, %v646
      %s652 = scalar_lea.vmem %s3, 7
      %v653 = vld [vmem:[%s652] ss:$8 sm:$0x3]
      %v655 = vperm.slane %v653, 0
      %v656 = vperm.slane %v653, 1
      %v659 = vmul.f32 %v651, %v655
      %v660 = vmul.f32 %v648, %v656
      %661 = vrot.lane.b32.xlu0 %v507, 15
      %v662 = vpop.permute.xlu0 %661
      %664 = vrot.lane.b32.xlu0 %v506, 15
      %v665 = vpop.permute.xlu0 %664
      %vm666 = vcmask 121856
      %v667 = vsel %vm666, %v665, %v662
      %v670 = vsel %vm666, %v662, %v665
      %s671 = scalar_lea.vmem %s3, 16
      %v672 = vld [vmem:[%s671] ss:$8 sm:$0x3]
      %v674 = vperm.slane %v672, 0
      %v675 = vperm.slane %v672, 1
      %v678 = vmul.f32 %v670, %v674
      %v679 = vmul.f32 %v667, %v675
      %680 = vrot.lane.b32.xlu0 %v507, 14
      %v681 = vpop.permute.xlu0 %680
      %683 = vrot.lane.b32.xlu0 %v506, 14
      %v684 = vpop.permute.xlu0 %683
      %vm685 = vcmask 113664
      %v686 = vsel %vm685, %v684, %v681
      %v689 = vsel %vm685, %v681, %v684
      %s690 = scalar_lea.vmem %s3, 17
      %v691 = vld [vmem:[%s690] ss:$8 sm:$0x3]
      %v693 = vperm.slane %v691, 0
      %v694 = vperm.slane %v691, 1
      %v697 = vmul.f32 %v689, %v693
      %v698 = vmul.f32 %v686, %v694
      %699 = vrot.lane.b32.xlu0 %v507, 2
      %v700 = vpop.permute.xlu0 %699
      %702 = vrot.lane.b32.xlu0 %v506, 2
      %v703 = vpop.permute.xlu0 %702
      %vm704 = vcmask 15360
      %v705 = vsel %vm704, %v703, %v700
      %v708 = vsel %vm704, %v700, %v703
      %s709 = scalar_lea.vmem %s3, 18
      %v710 = vld [vmem:[%s709] ss:$8 sm:$0x3]
      %v712 = vperm.slane %v710, 0
      %v713 = vperm.slane %v710, 1
      %v716 = vmul.f32 %v708, %v712
      %v717 = vmul.f32 %v705, %v713
      %718 = vrot.lane.b32.xlu0 %v507, 1
      %v719 = vpop.permute.xlu0 %718
      %721 = vrot.lane.b32.xlu0 %v506, 1
      %v722 = vpop.permute.xlu0 %721
      %vm723 = vcmask 7168
      %v724 = vsel %vm723, %v722, %v719
      %v727 = vsel %vm723, %v719, %v722
      %s728 = scalar_lea.vmem %s3, 19
      %v729 = vld [vmem:[%s728] ss:$8 sm:$0x3]
      %v731 = vperm.slane %v729, 0
      %v732 = vperm.slane %v729, 1
      %v735 = vmul.f32 %v727, %v731
      %v736 = vmul.f32 %v724, %v732
      %s737 = scalar_lea.vmem %s3, 20
      %v738 = vld [vmem:[%s737] ss:$8 sm:$0x3]
      %v740 = vperm.slane %v738, 0
      %v741 = vperm.slane %v738, 1
      %v744 = vmul.f32 %v506, %v740
      %v745 = vmul.f32 %v507, %v741
      %746 = vrot.lane.b32.xlu0 %v506, 127
      %v747 = vpop.permute.xlu0 %746
      %748 = vrot.lane.b32.xlu0 %v507, 127
      %v749 = vpop.permute.xlu0 %748
      %vm750 = vcmask 1039360
      %v751 = vsel %vm750, %v747, %v749
      %v755 = vsel %vm750, %v749, %v747
      %s756 = scalar_lea.vmem %s3, 21
      %v757 = vld [vmem:[%s756] ss:$8 sm:$0x3]
      %v759 = vperm.slane %v757, 0
      %v760 = vperm.slane %v757, 1
      %v763 = vmul.f32 %v751, %v759
      %v764 = vmul.f32 %v755, %v760
      %765 = vrot.lane.b32.xlu0 %v506, 126
      %v766 = vpop.permute.xlu0 %765
      %767 = vrot.lane.b32.xlu0 %v507, 126
      %v768 = vpop.permute.xlu0 %767
      %vm769 = vcmask 1031168
      %v770 = vsel %vm769, %v766, %v768
      %v774 = vsel %vm769, %v768, %v766
      %s775 = scalar_lea.vmem %s3, 22
      %v776 = vld [vmem:[%s775] ss:$8 sm:$0x3]
      %v778 = vperm.slane %v776, 0
      %v779 = vperm.slane %v776, 1
      %v782 = vmul.f32 %v770, %v778
      %v783 = vmul.f32 %v774, %v779
      %784 = vrot.lane.b32.xlu0 %v506, 114
      %v785 = vpop.permute.xlu0 %784
      %786 = vrot.lane.b32.xlu0 %v507, 114
      %v787 = vpop.permute.xlu0 %786
      %vm788 = vcmask 932864
      %v789 = vsel %vm788, %v785, %v787
      %v793 = vsel %vm788, %v787, %v785
      %s794 = scalar_lea.vmem %s3, 23
      %v795 = vld [vmem:[%s794] ss:$8 sm:$0x3]
      %v797 = vperm.slane %v795, 0
      %v798 = vperm.slane %v795, 1
      %v801 = vmul.f32 %v789, %v797
      %v802 = vmul.f32 %v793, %v798
      %803 = vrot.lane.b32.xlu0 %v506, 113
      %v804 = vpop.permute.xlu0 %803
      %805 = vrot.lane.b32.xlu0 %v507, 113
      %v806 = vpop.permute.xlu0 %805
      %vm807 = vcmask 924672
      %v808 = vsel %vm807, %v804, %v806
      %v812 = vsel %vm807, %v806, %v804
      %s813 = scalar_lea.vmem %s3, 32
      %v814 = vld [vmem:[%s813] ss:$8 sm:$0x3]
      %v816 = vperm.slane %v814, 0
      %v817 = vperm.slane %v814, 1
      %v820 = vmul.f32 %v808, %v816
      %v821 = vmul.f32 %v812, %v817
      %822 = vrot.lane.b32.xlu0 %v506, 112
      %v823 = vpop.permute.xlu0 %822
      %824 = vrot.lane.b32.xlu0 %v507, 112
      %v825 = vpop.permute.xlu0 %824
      %vm826 = vcmask 916480
      %v827 = vsel %vm826, %v823, %v825
      %v831 = vsel %vm826, %v825, %v823
      %s832 = scalar_lea.vmem %s3, 33
      %v833 = vld [vmem:[%s832] ss:$8 sm:$0x3]
      %v835 = vperm.slane %v833, 0
      %v836 = vperm.slane %v833, 1
      %v839 = vmul.f32 %v827, %v835
      %v840 = vmul.f32 %v831, %v836
      %841 = vrot.lane.b32.xlu0 %v506, 111
      %v842 = vpop.permute.xlu0 %841
      %843 = vrot.lane.b32.xlu0 %v507, 111
      %v844 = vpop.permute.xlu0 %843
      %vm845 = vcmask 908288
      %v846 = vsel %vm845, %v842, %v844
      %v850 = vsel %vm845, %v844, %v842
      %s851 = scalar_lea.vmem %s3, 34
      %v852 = vld [vmem:[%s851] ss:$8 sm:$0x3]
      %v854 = vperm.slane %v852, 0
      %v855 = vperm.slane %v852, 1
      %v858 = vmul.f32 %v846, %v854
      %v859 = vmul.f32 %v850, %v855
      %860 = vrot.lane.b32.xlu0 %v506, 110
      %v861 = vpop.permute.xlu0 %860
      %862 = vrot.lane.b32.xlu0 %v507, 110
      %v863 = vpop.permute.xlu0 %862
      %vm864 = vcmask 900096
      %v865 = vsel %vm864, %v861, %v863
      %v869 = vsel %vm864, %v863, %v861
      %s870 = scalar_lea.vmem %s3, 35
      %v871 = vld [vmem:[%s870] ss:$8 sm:$0x3]
      %v873 = vperm.slane %v871, 0
      %v874 = vperm.slane %v871, 1
      %v877 = vmul.f32 %v865, %v873
      %v878 = vmul.f32 %v869, %v874
      %879 = vrot.lane.b32.xlu0 %v506, 98
      %v880 = vpop.permute.xlu0 %879
      %881 = vrot.lane.b32.xlu0 %v507, 98
      %v882 = vpop.permute.xlu0 %881
      %vm883 = vcmask 801792
      %v884 = vsel %vm883, %v880, %v882
      %v888 = vsel %vm883, %v882, %v880
      %s889 = scalar_lea.vmem %s3, 36
      %v890 = vld [vmem:[%s889] ss:$8 sm:$0x3]
      %v892 = vperm.slane %v890, 0
      %v893 = vperm.slane %v890, 1
      %v896 = vmul.f32 %v884, %v892
      %v897 = vmul.f32 %v888, %v893
      %898 = vrot.lane.b32.xlu0 %v506, 97
      %v899 = vpop.permute.xlu0 %898
      %900 = vrot.lane.b32.xlu0 %v507, 97
      %v901 = vpop.permute.xlu0 %900
      %vm902 = vcmask 793600
      %v903 = vsel %vm902, %v899, %v901
      %v907 = vsel %vm902, %v901, %v899
      %s908 = scalar_lea.vmem %s3, 37
      %v909 = vld [vmem:[%s908] ss:$8 sm:$0x3]
      %v911 = vperm.slane %v909, 0
      %v912 = vperm.slane %v909, 1
      %v915 = vmul.f32 %v903, %v911
      %v916 = vmul.f32 %v907, %v912
      %917 = vrot.lane.b32.xlu0 %v506, 96
      %v918 = vpop.permute.xlu0 %917
      %919 = vrot.lane.b32.xlu0 %v507, 96
      %v920 = vpop.permute.xlu0 %919
      %vm921 = vcmask 785408
      %v922 = vsel %vm921, %v918, %v920
      %v926 = vsel %vm921, %v920, %v918
      %s927 = scalar_lea.vmem %s3, 38
      %v928 = vld [vmem:[%s927] ss:$8 sm:$0x3]
      %v930 = vperm.slane %v928, 0
      %v931 = vperm.slane %v928, 1
      %v934 = vmul.f32 %v922, %v930
      %v935 = vmul.f32 %v926, %v931
      %936 = vrot.lane.b32.xlu0 %v506, 95
      %v937 = vpop.permute.xlu0 %936
      %938 = vrot.lane.b32.xlu0 %v507, 95
      %v939 = vpop.permute.xlu0 %938
      %vm940 = vcmask 777216
      %v941 = vsel %vm940, %v937, %v939
      %v945 = vsel %vm940, %v939, %v937
      %s946 = scalar_lea.vmem %s3, 39
      %v947 = vld [vmem:[%s946] ss:$8 sm:$0x3]
      %v949 = vperm.slane %v947, 0
      %v950 = vperm.slane %v947, 1
      %v953 = vmul.f32 %v941, %v949
      %v954 = vmul.f32 %v945, %v950
      %955 = vrot.lane.b32.xlu0 %v506, 94
      %v956 = vpop.permute.xlu0 %955
      %957 = vrot.lane.b32.xlu0 %v507, 94
      %v958 = vpop.permute.xlu0 %957
      %vm959 = vcmask 769024
      %v960 = vsel %vm959, %v956, %v958
      %v964 = vsel %vm959, %v958, %v956
      %s965 = scalar_lea.vmem %s3, 48
      %v966 = vld [vmem:[%s965] ss:$8 sm:$0x3]
      %v968 = vperm.slane %v966, 0
      %v969 = vperm.slane %v966, 1
      %v972 = vmul.f32 %v960, %v968
      %v973 = vmul.f32 %v964, %v969
      %v974 = vld [vmem:[%s4] sm:$0xff]
      %v975 = vld [vmem:[%s5] sm:$0xf]
      %977 = vset.pattern.permute.xlu0 0
      %978 = vperm.xlu0 %977, %v975
      %v979 = vpop.permute.xlu0 %978
      %982 = vst [vmem:[#allocation1] ss:$2 sm:$0xff] %v974
      %v983 = vld.sshfl [vmem:[#allocation1] sm:$0xff pattern:$0x75316420]
      %v984 = vld.sshfl [vmem:[#allocation1 + $0x8] sm:$0xff pattern:$0x75316420]
      %vm986 = vcmask 588800
      %v987 = vsel %vm986, %v984, 0
      %989 = vmatpush.msra.mxu0 %v801
      %990 = vmatpush.msra.mxu0 %v782
      %991 = vmatpush.msra.mxu0 %v763
      %992 = vmatpush.msra.mxu0 %v744
      %993 = vmatpush.msra.mxu0 %v735
      %994 = vmatpush.msra.mxu0 %v716
      %995 = vmatpush.msra.mxu0 %v697
      %996 = vmatpush.msra.mxu0 %v678
      %997 = vmatpush.msra.mxu0 %v659
      %998 = vmatpush.msra.mxu0 %v640
      %999 = vmatpush.msra.mxu0 %v621
      %1000 = vmatpush.msra.mxu0 %v602
      %1001 = vmatpush.msra.mxu0 %v583
      %1002 = vmatpush.msra.mxu0 %v564
      %1003 = vmatpush.msra.mxu0 %v545
      %1004 = vmatpush.msra.mxu0 %v526
      %1005 = vmatmul.f32.gmra.mxu0 %v983
      %v1006 = vpop.f32.mrf.mxu0
      %v1007 = vadd.f32 %v979, %v1006
      %1008 = vdwg.mxu0
      %1009 = vmatpush.msra.mxu0 0.0
      %1010 = vmatpush.msra.mxu0 0.0
      %1011 = vmatpush.msra.mxu0 0.0
      %1012 = vmatpush.msra.mxu0 0.0
      %1013 = vmatpush.msra.mxu0 0.0
      %1014 = vmatpush.msra.mxu0 0.0
      %1015 = vmatpush.msra.mxu0 0.0
      %1016 = vmatpush.msra.mxu0 %v972
      %1017 = vmatpush.msra.mxu0 %v953
      %1018 = vmatpush.msra.mxu0 %v934
      %1019 = vmatpush.msra.mxu0 %v915
      %1020 = vmatpush.msra.mxu0 %v896
      %1021 = vmatpush.msra.mxu0 %v877
      %1022 = vmatpush.msra.mxu0 %v858
      %1023 = vmatpush.msra.mxu0 %v839
      %1024 = vmatpush.msra.mxu0 %v820
      %1025 = vmatmul.f32.gmra.mxu0 %v987
      %v1026 = vpop.f32.mrf.mxu0
      %v1027 = vadd.f32 %v1007, %v1026
      %1028 = vdwg.mxu0
      %1029 = vmatpush.msra.mxu0 %v802
      %1030 = vmatpush.msra.mxu0 %v783
      %1031 = vmatpush.msra.mxu0 %v764
      %1032 = vmatpush.msra.mxu0 %v745
      %1033 = vmatpush.msra.mxu0 %v736
      %1034 = vmatpush.msra.mxu0 %v717
      %1035 = vmatpush.msra.mxu0 %v698
      %1036 = vmatpush.msra.mxu0 %v679
      %1037 = vmatpush.msra.mxu0 %v660
      %1038 = vmatpush.msra.mxu0 %v641
      %1039 = vmatpush.msra.mxu0 %v622
      %1040 = vmatpush.msra.mxu0 %v603
      %1041 = vmatpush.msra.mxu0 %v584
      %1042 = vmatpush.msra.mxu0 %v565
      %1043 = vmatpush.msra.mxu0 %v546
      %1044 = vmatpush.msra.mxu0 %v527
      %1045 = vmatmul.f32.gmra.mxu0 %v983
      %v1046 = vpop.f32.mrf.mxu0
      %v1047 = vadd.f32 %v979, %v1046
      %1048 = vdwg.mxu0
      %1049 = vmatpush.msra.mxu0 0.0
      %1050 = vmatpush.msra.mxu0 0.0
      %1051 = vmatpush.msra.mxu0 0.0
      %1052 = vmatpush.msra.mxu0 0.0
      %1053 = vmatpush.msra.mxu0 0.0
      %1054 = vmatpush.msra.mxu0 0.0
      %1055 = vmatpush.msra.mxu0 0.0
      %1056 = vmatpush.msra.mxu0 %v973
      %1057 = vmatpush.msra.mxu0 %v954
      %1058 = vmatpush.msra.mxu0 %v935
      %1059 = vmatpush.msra.mxu0 %v916
      %1060 = vmatpush.msra.mxu0 %v897
      %1061 = vmatpush.msra.mxu0 %v878
      %1062 = vmatpush.msra.mxu0 %v859
      %1063 = vmatpush.msra.mxu0 %v840
      %1064 = vmatpush.msra.mxu0 %v821
      %1065 = vmatmul.f32.gmra.mxu0 %v987
      %v1066 = vpop.f32.mrf.mxu0
      %v1067 = vadd.f32 %v1047, %v1066
      %1068 = vdwg.mxu0
      %v1069 = vsel %vm505, %v1027, 0.0
      %v1070 = vsel %vm505, %v1067, 0.0
      %v1071 = vadd.f32 %v1069, %v1070
      %1072 = vadd.xlane.f32.xlu0 %v1071
      %v1073 = vpop.xlane.xlu0 %1072
      %v1074 = vrot.slane %v1073, 4
      %v1075 = vadd.f32 %v1073, %v1074
      %v1076 = vrot.slane %v1075, 2
      %v1077 = vadd.f32 %v1075, %v1076
      %v1078 = vrot.slane %v1077, 1
      %v1079 = vadd.f32 %v1077, %v1078
      %s1080 = vtos %v1079
      %v1081 = vrcp.pop 1024.0
      %v1082 = vmul.f32 1024.0, %v1081
      %v1083 = vsub.f32 1.0, %v1082
      %v1084 = vmul.f32 %v1081, %v1083
      %v1085 = vadd.f32 %v1081, %v1084
      %vm1086 = vweird.f32 %v1081
      %v1087 = vsel %vm1086, %v1081, %v1085
      %s1088 = vtos %v1087
      %s1089 = smul.f32 %s1080, %s1088
      %v1090 = vmul.f32 %v1027, %v1027
      %v1091 = vmul.f32 %v1067, %v1067
      %v1092 = vsel %vm505, %v1090, 0.0
      %v1093 = vsel %vm505, %v1091, 0.0
      %v1094 = vadd.f32 %v1092, %v1093
      %1095 = vadd.xlane.f32.xlu0 %v1094
      %v1096 = vpop.xlane.xlu0 %1095
      %v1097 = vrot.slane %v1096, 4
      %v1098 = vadd.f32 %v1096, %v1097
      %v1099 = vrot.slane %v1098, 2
      %v1100 = vadd.f32 %v1098, %v1099
      %v1101 = vrot.slane %v1100, 1
      %v1102 = vadd.f32 %v1100, %v1101
      %s1103 = vtos %v1102
      %v1104 = vrcp.pop 1024.0
      %v1105 = vmul.f32 1024.0, %v1104
      %v1106 = vsub.f32 1.0, %v1105
      %v1107 = vmul.f32 %v1104, %v1106
      %v1108 = vadd.f32 %v1104, %v1107
      %vm1109 = vweird.f32 %v1104
      %v1110 = vsel %vm1109, %v1104, %v1108
      %s1111 = vtos %v1110
      %s1112 = smul.f32 %s1103, %s1111
      %s1113 = smul.f32 %s1089, %s1089
      %s1114 = ssub.f32 %s1112, %s1113
      %v1115 = vstv %s1089
      %v1116 = vsub.f32 %v1027, %v1115
      %v1117 = vsub.f32 %v1067, %v1115
      %s1118 = sadd.f32 %s1114, 1e-05
      %v1119 = vstv %s1118
      %v1120 = vrsqrt.pop %v1119
      %v1121 = vmul.f32 %v1120, %v1119
      %v1122 = vmul.f32 %v1121, %v1120
      %v1123 = vmul.f32 0.5, %v1122
      %v1124 = vsub.f32 1.5, %v1123
      %v1125 = vmul.f32 %v1120, %v1124
      %vm1126 = vweird.f32 %v1119
      %vm1127 = vweird.f32 %v1120
      %vm1128 = vmor %vm1126, %vm1127
      %v1129 = vsel %vm1128, %v1120, %v1125
      %s1130 = vtos %v1129
      %v1131 = vstv %s1130
      %v1132 = vmul.f32 %v1116, %v1131
      %v1133 = vmul.f32 %v1117, %v1131
      %v1134 = vld [vmem:[%s6] sm:$0xf]
      %1136 = vset.pattern.permute.xlu0 0
      %1137 = vperm.xlu0 %1136, %v1134
      %v1138 = vpop.permute.xlu0 %1137
      %v1140 = vmul.f32 %v1132, %v1138
      %v1141 = vmul.f32 %v1133, %v1138
      %v1142 = vld [vmem:[%s7] sm:$0xf]
      %1144 = vset.pattern.permute.xlu0 0
      %1145 = vperm.xlu0 %1144, %v1142
      %v1146 = vpop.permute.xlu0 %1145
      %v1148 = vadd.f32 %v1140, %v1146
      %v1149 = vadd.f32 %v1141, %v1146
      %v1150 = vmax.f32 %v1148, 0.0
      %v1151 = vmax.f32 %v1149, 0.0
      %1153 = vrot.lane.b32.xlu0 %v1151, 34
      %v1154 = vpop.permute.xlu0 %1153
      %1157 = vrot.lane.b32.xlu0 %v1150, 34
      %v1158 = vpop.permute.xlu0 %1157
      %v1159 = vsel %vm515, %v1158, %v1154
      %v1162 = vsel %vm515, %v1154, %v1158
      %v1163 = vmul.f32 %v1162, %v522
      %v1164 = vmul.f32 %v1159, %v523
      %1165 = vrot.lane.b32.xlu0 %v1151, 33
      %v1166 = vpop.permute.xlu0 %1165
      %1168 = vrot.lane.b32.xlu0 %v1150, 33
      %v1169 = vpop.permute.xlu0 %1168
      %v1170 = vsel %vm533, %v1169, %v1166
      %v1173 = vsel %vm533, %v1166, %v1169
      %v1174 = vmul.f32 %v1173, %v541
      %v1175 = vmul.f32 %v1170, %v542
      %1176 = vrot.lane.b32.xlu0 %v1151, 32
      %v1177 = vpop.permute.xlu0 %1176
      %1179 = vrot.lane.b32.xlu0 %v1150, 32
      %v1180 = vpop.permute.xlu0 %1179
      %v1181 = vsel %vm552, %v1180, %v1177
      %v1184 = vsel %vm552, %v1177, %v1180
      %v1185 = vmul.f32 %v1184, %v560
      %v1186 = vmul.f32 %v1181, %v561
      %1187 = vrot.lane.b32.xlu0 %v1151, 31
      %v1188 = vpop.permute.xlu0 %1187
      %1190 = vrot.lane.b32.xlu0 %v1150, 31
      %v1191 = vpop.permute.xlu0 %1190
      %v1192 = vsel %vm571, %v1191, %v1188
      %v1195 = vsel %vm571, %v1188, %v1191
      %v1196 = vmul.f32 %v1195, %v579
      %v1197 = vmul.f32 %v1192, %v580
      %1198 = vrot.lane.b32.xlu0 %v1151, 30
      %v1199 = vpop.permute.xlu0 %1198
      %1201 = vrot.lane.b32.xlu0 %v1150, 30
      %v1202 = vpop.permute.xlu0 %1201
      %v1203 = vsel %vm590, %v1202, %v1199
      %v1206 = vsel %vm590, %v1199, %v1202
      %v1207 = vmul.f32 %v1206, %v598
      %v1208 = vmul.f32 %v1203, %v599
      %1209 = vrot.lane.b32.xlu0 %v1151, 18
      %v1210 = vpop.permute.xlu0 %1209
      %1212 = vrot.lane.b32.xlu0 %v1150, 18
      %v1213 = vpop.permute.xlu0 %1212
      %v1214 = vsel %vm609, %v1213, %v1210
      %v1217 = vsel %vm609, %v1210, %v1213
      %v1218 = vmul.f32 %v1217, %v617
      %v1219 = vmul.f32 %v1214, %v618
      %1220 = vrot.lane.b32.xlu0 %v1151, 17
      %v1221 = vpop.permute.xlu0 %1220
      %1223 = vrot.lane.b32.xlu0 %v1150, 17
      %v1224 = vpop.permute.xlu0 %1223
      %v1225 = vsel %vm628, %v1224, %v1221
      %v1228 = vsel %vm628, %v1221, %v1224
      %v1229 = vmul.f32 %v1228, %v636
      %v1230 = vmul.f32 %v1225, %v637
      %1231 = vrot.lane.b32.xlu0 %v1151, 16
      %v1232 = vpop.permute.xlu0 %1231
      %1234 = vrot.lane.b32.xlu0 %v1150, 16
      %v1235 = vpop.permute.xlu0 %1234
      %v1236 = vsel %vm647, %v1235, %v1232
      %v1239 = vsel %vm647, %v1232, %v1235
      %v1240 = vmul.f32 %v1239, %v655
      %v1241 = vmul.f32 %v1236, %v656
      %1242 = vrot.lane.b32.xlu0 %v1151, 15
      %v1243 = vpop.permute.xlu0 %1242
      %1245 = vrot.lane.b32.xlu0 %v1150, 15
      %v1246 = vpop.permute.xlu0 %1245
      %v1247 = vsel %vm666, %v1246, %v1243
      %v1250 = vsel %vm666, %v1243, %v1246
      %v1251 = vmul.f32 %v1250, %v674
      %v1252 = vmul.f32 %v1247, %v675
      %1253 = vrot.lane.b32.xlu0 %v1151, 14
      %v1254 = vpop.permute.xlu0 %1253
      %1256 = vrot.lane.b32.xlu0 %v1150, 14
      %v1257 = vpop.permute.xlu0 %1256
      %v1258 = vsel %vm685, %v1257, %v1254
      %v1261 = vsel %vm685, %v1254, %v1257
      %v1262 = vmul.f32 %v1261, %v693
      %v1263 = vmul.f32 %v1258, %v694
      %1264 = vrot.lane.b32.xlu0 %v1151, 2
      %v1265 = vpop.permute.xlu0 %1264
      %1267 = vrot.lane.b32.xlu0 %v1150, 2
      %v1268 = vpop.permute.xlu0 %1267
      %v1269 = vsel %vm704, %v1268, %v1265
      %v1272 = vsel %vm704, %v1265, %v1268
      %v1273 = vmul.f32 %v1272, %v712
      %v1274 = vmul.f32 %v1269, %v713
      %1275 = vrot.lane.b32.xlu0 %v1151, 1
      %v1276 = vpop.permute.xlu0 %1275
      %1278 = vrot.lane.b32.xlu0 %v1150, 1
      %v1279 = vpop.permute.xlu0 %1278
      %v1280 = vsel %vm723, %v1279, %v1276
      %v1283 = vsel %vm723, %v1276, %v1279
      %v1284 = vmul.f32 %v1283, %v731
      %v1285 = vmul.f32 %v1280, %v732
      %v1286 = vmul.f32 %v1150, %v740
      %v1287 = vmul.f32 %v1151, %v741
      %1288 = vrot.lane.b32.xlu0 %v1150, 127
      %v1289 = vpop.permute.xlu0 %1288
      %1290 = vrot.lane.b32.xlu0 %v1151, 127
      %v1291 = vpop.permute.xlu0 %1290
      %v1292 = vsel %vm750, %v1289, %v1291
      %v1296 = vsel %vm750, %v1291, %v1289
      %v1297 = vmul.f32 %v1292, %v759
      %v1298 = vmul.f32 %v1296, %v760
      %1299 = vrot.lane.b32.xlu0 %v1150, 126
      %v1300 = vpop.permute.xlu0 %1299
      %1301 = vrot.lane.b32.xlu0 %v1151, 126
      %v1302 = vpop.permute.xlu0 %1301
      %v1303 = vsel %vm769, %v1300, %v1302
      %v1307 = vsel %vm769, %v1302, %v1300
      %v1308 = vmul.f32 %v1303, %v778
      %v1309 = vmul.f32 %v1307, %v779
      %1310 = vrot.lane.b32.xlu0 %v1150, 114
      %v1311 = vpop.permute.xlu0 %1310
      %1312 = vrot.lane.b32.xlu0 %v1151, 114
      %v1313 = vpop.permute.xlu0 %1312
      %v1314 = vsel %vm788, %v1311, %v1313
      %v1318 = vsel %vm788, %v1313, %v1311
      %v1319 = vmul.f32 %v1314, %v797
      %v1320 = vmul.f32 %v1318, %v798
      %1321 = vrot.lane.b32.xlu0 %v1150, 113
      %v1322 = vpop.permute.xlu0 %1321
      %1323 = vrot.lane.b32.xlu0 %v1151, 113
      %v1324 = vpop.permute.xlu0 %1323
      %v1325 = vsel %vm807, %v1322, %v1324
      %v1329 = vsel %vm807, %v1324, %v1322
      %v1330 = vmul.f32 %v1325, %v816
      %v1331 = vmul.f32 %v1329, %v817
      %1332 = vrot.lane.b32.xlu0 %v1150, 112
      %v1333 = vpop.permute.xlu0 %1332
      %1334 = vrot.lane.b32.xlu0 %v1151, 112
      %v1335 = vpop.permute.xlu0 %1334
      %v1336 = vsel %vm826, %v1333, %v1335
      %v1340 = vsel %vm826, %v1335, %v1333
      %v1341 = vmul.f32 %v1336, %v835
      %v1342 = vmul.f32 %v1340, %v836
      %1343 = vrot.lane.b32.xlu0 %v1150, 111
      %v1344 = vpop.permute.xlu0 %1343
      %1345 = vrot.lane.b32.xlu0 %v1151, 111
      %v1346 = vpop.permute.xlu0 %1345
      %v1347 = vsel %vm845, %v1344, %v1346
      %v1351 = vsel %vm845, %v1346, %v1344
      %v1352 = vmul.f32 %v1347, %v854
      %v1353 = vmul.f32 %v1351, %v855
      %1354 = vrot.lane.b32.xlu0 %v1150, 110
      %v1355 = vpop.permute.xlu0 %1354
      %1356 = vrot.lane.b32.xlu0 %v1151, 110
      %v1357 = vpop.permute.xlu0 %1356
      %v1358 = vsel %vm864, %v1355, %v1357
      %v1362 = vsel %vm864, %v1357, %v1355
      %v1363 = vmul.f32 %v1358, %v873
      %v1364 = vmul.f32 %v1362, %v874
      %1365 = vrot.lane.b32.xlu0 %v1150, 98
      %v1366 = vpop.permute.xlu0 %1365
      %1367 = vrot.lane.b32.xlu0 %v1151, 98
      %v1368 = vpop.permute.xlu0 %1367
      %v1369 = vsel %vm883, %v1366, %v1368
      %v1373 = vsel %vm883, %v1368, %v1366
      %v1374 = vmul.f32 %v1369, %v892
      %v1375 = vmul.f32 %v1373, %v893
      %1376 = vrot.lane.b32.xlu0 %v1150, 97
      %v1377 = vpop.permute.xlu0 %1376
      %1378 = vrot.lane.b32.xlu0 %v1151, 97
      %v1379 = vpop.permute.xlu0 %1378
      %v1380 = vsel %vm902, %v1377, %v1379
      %v1384 = vsel %vm902, %v1379, %v1377
      %v1385 = vmul.f32 %v1380, %v911
      %v1386 = vmul.f32 %v1384, %v912
      %1387 = vrot.lane.b32.xlu0 %v1150, 96
      %v1388 = vpop.permute.xlu0 %1387
      %1389 = vrot.lane.b32.xlu0 %v1151, 96
      %v1390 = vpop.permute.xlu0 %1389
      %v1391 = vsel %vm921, %v1388, %v1390
      %v1395 = vsel %vm921, %v1390, %v1388
      %v1396 = vmul.f32 %v1391, %v930
      %v1397 = vmul.f32 %v1395, %v931
      %1398 = vrot.lane.b32.xlu0 %v1150, 95
      %v1399 = vpop.permute.xlu0 %1398
      %1400 = vrot.lane.b32.xlu0 %v1151, 95
      %v1401 = vpop.permute.xlu0 %1400
      %v1402 = vsel %vm940, %v1399, %v1401
      %v1406 = vsel %vm940, %v1401, %v1399
      %v1407 = vmul.f32 %v1402, %v949
      %v1408 = vmul.f32 %v1406, %v950
      %1409 = vrot.lane.b32.xlu0 %v1150, 94
      %v1410 = vpop.permute.xlu0 %1409
      %1411 = vrot.lane.b32.xlu0 %v1151, 94
      %v1412 = vpop.permute.xlu0 %1411
      %v1413 = vsel %vm959, %v1410, %v1412
      %v1417 = vsel %vm959, %v1412, %v1410
      %v1418 = vmul.f32 %v1413, %v968
      %v1419 = vmul.f32 %v1417, %v969
      %v1422 = vrot.slane %v1174, 4
      %v1423 = vrot.slane %v1175, 4
      %v1428 = vrot.slane %v1196, 4
      %v1429 = vrot.slane %v1197, 4
      %v1434 = vrot.slane %v1218, 4
      %v1435 = vrot.slane %v1219, 4
      %v1440 = vrot.slane %v1240, 4
      %v1441 = vrot.slane %v1241, 4
      %v1446 = vrot.slane %v1262, 4
      %v1447 = vrot.slane %v1263, 4
      %v1452 = vrot.slane %v1284, 4
      %v1453 = vrot.slane %v1285, 4
      %v1458 = vrot.slane %v1297, 4
      %v1459 = vrot.slane %v1298, 4
      %v1464 = vrot.slane %v1319, 4
      %v1465 = vrot.slane %v1320, 4
      %v1468 = vsel %vm505, %v1163, %v1422
      %v1469 = vsel %vm505, %v1164, %v1423
      %v1470 = vsel %vm505, %v1185, %v1428
      %v1471 = vsel %vm505, %v1186, %v1429
      %v1472 = vsel %vm505, %v1207, %v1434
      %v1473 = vsel %vm505, %v1208, %v1435
      %v1474 = vsel %vm505, %v1229, %v1440
      %v1475 = vsel %vm505, %v1230, %v1441
      %v1476 = vsel %vm505, %v1251, %v1446
      %v1477 = vsel %vm505, %v1252, %v1447
      %v1478 = vsel %vm505, %v1273, %v1452
      %v1479 = vsel %vm505, %v1274, %v1453
      %v1480 = vsel %vm505, %v1286, %v1458
      %v1481 = vsel %vm505, %v1287, %v1459
      %v1482 = vsel %vm505, %v1308, %v1464
      %v1483 = vsel %vm505, %v1309, %v1465
      %v1486 = vrot.slane %v1341, 4
      %v1487 = vrot.slane %v1342, 4
      %v1492 = vrot.slane %v1363, 4
      %v1493 = vrot.slane %v1364, 4
      %v1498 = vrot.slane %v1385, 4
      %v1499 = vrot.slane %v1386, 4
      %v1504 = vrot.slane %v1407, 4
      %v1505 = vrot.slane %v1408, 4
      %v1508 = vsel %vm505, %v1330, %v1486
      %v1509 = vsel %vm505, %v1331, %v1487
      %v1510 = vsel %vm505, %v1352, %v1492
      %v1511 = vsel %vm505, %v1353, %v1493
      %v1512 = vsel %vm505, %v1374, %v1498
      %v1513 = vsel %vm505, %v1375, %v1499
      %v1514 = vsel %vm505, %v1396, %v1504
      %v1515 = vsel %vm505, %v1397, %v1505
      %v1516 = vld [vmem:[%s8] sm:$0xf]
      %v1517 = vld [vmem:[%s9] sm:$0xf]
      %1519 = vset.pattern.permute.xlu0 0
      %1520 = vperm.xlu0 %1519, %v1517
      %v1521 = vpop.permute.xlu0 %1520
      %vm1523 = vcmask 818176
      %v1525 = vsel %vm1523, %v1516, 0
      %v1528 = vsel %vm505, %v1418, 0
      %v1531 = vsel %vm505, %v1419, 0
      %1533 = vmatpush.msra.mxu0 0.0
      %1534 = vmatpush.msra.mxu0 0.0
      %1535 = vmatpush.msra.mxu0 0.0
      %1536 = vmatpush.msra.mxu0 %v1528
      %1537 = vmatpush.msra.mxu0 %v1514
      %1538 = vmatpush.msra.mxu0 %v1512
      %1539 = vmatpush.msra.mxu0 %v1510
      %1540 = vmatpush.msra.mxu0 %v1508
      %1541 = vmatpush.msra.mxu0 %v1482
      %1542 = vmatpush.msra.mxu0 %v1480
      %1543 = vmatpush.msra.mxu0 %v1478
      %1544 = vmatpush.msra.mxu0 %v1476
      %1545 = vmatpush.msra.mxu0 %v1474
      %1546 = vmatpush.msra.mxu0 %v1472
      %1547 = vmatpush.msra.mxu0 %v1470
      %1548 = vmatpush.msra.mxu0 %v1468
      %1549 = vmatmul.f32.gmra.mxu0 %v1525
      %v1550 = vpop.f32.mrf.mxu0
      %v1551 = vadd.f32 %v1521, %v1550
      %1552 = vdwg.mxu0
      %1553 = vmatpush.msra.mxu0 0.0
      %1554 = vmatpush.msra.mxu0 0.0
      %1555 = vmatpush.msra.mxu0 0.0
      %1556 = vmatpush.msra.mxu0 %v1531
      %1557 = vmatpush.msra.mxu0 %v1515
      %1558 = vmatpush.msra.mxu0 %v1513
      %1559 = vmatpush.msra.mxu0 %v1511
      %1560 = vmatpush.msra.mxu0 %v1509
      %1561 = vmatpush.msra.mxu0 %v1483
      %1562 = vmatpush.msra.mxu0 %v1481
      %1563 = vmatpush.msra.mxu0 %v1479
      %1564 = vmatpush.msra.mxu0 %v1477
      %1565 = vmatpush.msra.mxu0 %v1475
      %1566 = vmatpush.msra.mxu0 %v1473
      %1567 = vmatpush.msra.mxu0 %v1471
      %1568 = vmatpush.msra.mxu0 %v1469
      %1569 = vmatmul.f32.gmra.mxu0 %v1525
      %v1570 = vpop.f32.mrf.mxu0
      %v1571 = vadd.f32 %v1521, %v1570
      %1572 = vdwg.mxu0
      %v1573 = vsel %vm505, %v1551, 0.0
      %v1574 = vsel %vm505, %v1571, 0.0
      %v1575 = vadd.f32 %v1573, %v1574
      %1576 = vadd.xlane.f32.xlu0 %v1575
      %v1577 = vpop.xlane.xlu0 %1576
      %v1578 = vrot.slane %v1577, 4
      %v1579 = vadd.f32 %v1577, %v1578
      %v1580 = vrot.slane %v1579, 2
      %v1581 = vadd.f32 %v1579, %v1580
      %v1582 = vrot.slane %v1581, 1
      %v1583 = vadd.f32 %v1581, %v1582
      %s1584 = vtos %v1583
      %v1585 = vrcp.pop 1024.0
      %v1586 = vmul.f32 1024.0, %v1585
      %v1587 = vsub.f32 1.0, %v1586
      %v1588 = vmul.f32 %v1585, %v1587
      %v1589 = vadd.f32 %v1585, %v1588
      %vm1590 = vweird.f32 %v1585
      %v1591 = vsel %vm1590, %v1585, %v1589
      %s1592 = vtos %v1591
      %s1593 = smul.f32 %s1584, %s1592
      %v1594 = vmul.f32 %v1551, %v1551
      %v1595 = vmul.f32 %v1571, %v1571
      %v1596 = vsel %vm505, %v1594, 0.0
      %v1597 = vsel %vm505, %v1595, 0.0
      %v1598 = vadd.f32 %v1596, %v1597
      %1599 = vadd.xlane.f32.xlu0 %v1598
      %v1600 = vpop.xlane.xlu0 %1599
      %v1601 = vrot.slane %v1600, 4
      %v1602 = vadd.f32 %v1600, %v1601
      %v1603 = vrot.slane %v1602, 2
      %v1604 = vadd.f32 %v1602, %v1603
      %v1605 = vrot.slane %v1604, 1
      %v1606 = vadd.f32 %v1604, %v1605
      %s1607 = vtos %v1606
      %v1608 = vrcp.pop 1024.0
      %v1609 = vmul.f32 1024.0, %v1608
      %v1610 = vsub.f32 1.0, %v1609
      %v1611 = vmul.f32 %v1608, %v1610
      %v1612 = vadd.f32 %v1608, %v1611
      %vm1613 = vweird.f32 %v1608
      %v1614 = vsel %vm1613, %v1608, %v1612
      %s1615 = vtos %v1614
      %s1616 = smul.f32 %s1607, %s1615
      %s1617 = smul.f32 %s1593, %s1593
      %s1618 = ssub.f32 %s1616, %s1617
      %v1619 = vstv %s1593
      %v1620 = vsub.f32 %v1551, %v1619
      %v1621 = vsub.f32 %v1571, %v1619
      %s1622 = sadd.f32 %s1618, 1e-05
      %v1623 = vstv %s1622
      %v1624 = vrsqrt.pop %v1623
      %v1625 = vmul.f32 %v1624, %v1623
      %v1626 = vmul.f32 %v1625, %v1624
      %v1627 = vmul.f32 0.5, %v1626
      %v1628 = vsub.f32 1.5, %v1627
      %v1629 = vmul.f32 %v1624, %v1628
      %vm1630 = vweird.f32 %v1623
      %vm1631 = vweird.f32 %v1624
      %vm1632 = vmor %vm1630, %vm1631
      %v1633 = vsel %vm1632, %v1624, %v1629
      %s1634 = vtos %v1633
      %v1635 = vstv %s1634
      %v1636 = vmul.f32 %v1620, %v1635
      %v1637 = vmul.f32 %v1621, %v1635
      %v1638 = vld [vmem:[%s10] sm:$0xf]
      %1640 = vset.pattern.permute.xlu0 0
      %1641 = vperm.xlu0 %1640, %v1638
      %v1642 = vpop.permute.xlu0 %1641
      %v1644 = vmul.f32 %v1636, %v1642
      %v1645 = vmul.f32 %v1637, %v1642
      %v1646 = vld [vmem:[%s11] sm:$0xf]
      %1648 = vset.pattern.permute.xlu0 0
      %1649 = vperm.xlu0 %1648, %v1646
      %v1650 = vpop.permute.xlu0 %1649
      %v1652 = vadd.f32 %v1644, %v1650
      %v1653 = vadd.f32 %v1645, %v1650
      %v1654 = vmax.f32 %v1652, 0.0
      %v1655 = vmax.f32 %v1653, 0.0
      %v1658 = vrot.slane %v1655, 4
      %v1659 = vsel %vm505, %v1654, %v1658
      %1661 = vst [vmem:[%s430] sm:$0xff] %v1659
      %p1662 = scmp.lt.s32.totalorder %s23, 1
      %s1663 = scalar_select %p1662, %s23, 1
      %s1664 = smul.addr %s1663, 2
      %s1665 = smul.addr %s1664, 4
      %s1666 = scalar_lea.vmem %s12, %s1665
      // Predicated region
      $region69: #{decoding_block_forward.1} parent=67 // pred_check
        %p1667 = pneg %p303
      $region70: #{decoding_block_forward.1} parent=67 // pred_check_branch
        %1669 = sbr.rel (%p1667) target = $region72
      $region71: #{decoding_block_forward.1} parent=67 // pred_region
        _
      $region72: #{decoding_block_forward.1} parent=67 // pred_fallthru
        _
    $region68: #{decoding_block_forward.1} parent=5 // pred_fallthru
      _
    %p1670 = scmp.le.s32.totalorder 2, %s18
    // Predicated region
    $region73: #{decoding_block_forward.1} parent=5 // pred_check
      %p1671 = pneg %p1670
    $region74: #{decoding_block_forward.1} parent=5 // pred_check_branch
      %1673 = sbr.rel (%p1671) target = $region76
    $region75: #{decoding_block_forward.1} parent=5 // pred_region
      %s1674 = ssub.s32 %s18, 2
      // Predicated region
      $region77: #{decoding_block_forward.1} parent=75 // pred_check
        %p1675 = pneg %p309
      $region78: #{decoding_block_forward.1} parent=75 // pred_check_branch
        %1677 = sbr.rel (%p1675) target = $region80
      $region79: #{decoding_block_forward.1} parent=75 // pred_region
        %p1678 = scmp.lt.s32.totalorder %s24, 1
        %s1679 = scalar_select %p1678, %s24, 1
        %s1680 = smul.addr %s1679, 2
        %s1681 = smul.addr %s1680, 4
        %s1682 = scalar_lea.vmem %s12, %s1681
      $region80: #{decoding_block_forward.1} parent=75 // pred_fallthru
        _
    $region76: #{decoding_block_forward.1} parent=5 // pred_fallthru
      _
  $region6: #{decoding_block_forward.1} parent=0 // loop_footer
    %s22 = sadd.s32 1, %s18
  $region7: #{decoding_block_forward.1} parent=0 // loop_footer_branch
    %17 = sbr.rel target = $region3
  $region8: #{decoding_block_forward.1} parent=0 // loop_exit
    _

</llo_original>
